<compile_context>
chip_gen: v7x
topology: tpu7x:2x2x1
jax: 0.10.0
libtpu: 0.0.40
codegen_flags: <defaults>
</compile_context>

<pallas_src>
import math

import jax
import jax.numpy as jnp
from jax.experimental import pallas as pl
from jax.experimental.pallas import tpu as pltpu

SLOPE = 0.01
_BBLK_CAP = 8   # per-step VMEM ~ Bblk*320KiB intermediates + ~4MiB params
                # -> comfortably inside the 16MiB (v5e) / 32MiB (v6e/v7x)
                # default scoped-VMEM on all generations.


def _pick_bblk(B, cap=_BBLK_CAP):
    best = 1
    for d in range(1, min(B, cap) + 1):
        if B % d == 0:
            best = d
    return best


# ----------------------------------------------------------------------------
# Fused kernel: joint MLP + per-channel matmul + final Linear (wide layout).
# ----------------------------------------------------------------------------
def _make_kernel(N, Fin, C, L, Bblk):
    CN = C * N

    def kernel(x_ref, *refs):
        out_ref = refs[-1]
        params = refs[:-1]
        wk_refs = params[:L]            # Kron-expanded joint (m1|m2) weights
        b_all = params[L][...]          # (L, 2*C*N) packed biases
        w4a = params[L + 1][...]        # (C*N, C*N)
        w4b = params[L + 2][...]        # (Fin*N, C*N)
        b4 = params[L + 3][...]         # (1, C*N)
        mask = params[L + 4][...]       # (C, N, C*N) block-diag 0/1 mask

        xw = x_ref[...]                 # (Bblk*N, Fin*N), lanes = f*N + j

        # Joint m1/m2 MLP: each layer is one lane-dense MXU matmul.
        h = xw
        for i in range(L):
            h = jnp.dot(h, wk_refs[i][...], preferred_element_type=jnp.float32)
            h = h + b_all[i:i + 1, :]
            if i != L - 1:
                h = jnp.where(h >= 0, h, SLOPE * h)        # LeakyReLU

        # Split the two branches; within a row, lane index is c*N + (N-pos).
        o1 = h[:, :CN].reshape(Bblk, N, CN)   # o1[b, i, c*N + k] = out1[b,c,i,k]
        o2 = h[:, CN:].reshape(Bblk, N, CN)   # o2[b, k, c*N + j] = out2[b,c,k,j]

        # Per-channel product as one wide MXU matmul per sample (K = C*N):
        #   R[b, c'*N + k, c*N + j] = out2[b, c, k, j] * [c' == c]
        r = (o2[:, None, :, :] * mask[None, :, :, :]).reshape(Bblk, CN, CN)
        prod = jnp.einsum('bik,bkj->bij', o1, r,
                          preferred_element_type=jnp.float32)   # (Bblk, N, CN)
        prod = prod.reshape(Bblk * N, CN)     # prod[b*N + i, c*N + j]
        # (1/sqrt(N) is already folded into the m1 half of the last layer.)

        # Final Linear on concat([prod, x]) == prod @ W4a + x @ W4b + b4,
        # Kron-expanded so the result stays in the wide lane-dense layout.
        y = (jnp.dot(prod, w4a, preferred_element_type=jnp.float32)
             + jnp.dot(xw, w4b, preferred_element_type=jnp.float32)
             + b4)
        out_ref[...] = y                      # (Bblk*N, C*N) unmasked stores

    return kernel


# ----------------------------------------------------------------------------
# Wrapper
# ----------------------------------------------------------------------------
def powerful_layer(x, m1_params, m2_params, W4, b4):
    """x: (B, N, N, in_feat).  Returns (B, N, N, out_feat)."""
    B, N, N2, Fin = x.shape
    assert N == N2
    C = m1_params[-1][0].shape[1]
    L = len(m1_params)
    f32 = jnp.float32
    inv_norm = 1.0 / math.sqrt(N)
    eyeN = jnp.eye(N, dtype=f32)

    def kron(W):
        # (din, dout) -> (din*N, dout*N) with W_k[(d,j'),(c,j)] = W[d,c]*[j==j'].
        din, dout = W.shape
        return (W.astype(f32)[:, None, :, None] * eyeN[None, :, None, :]
                ).reshape(din * N, dout * N)

    # Merge m1/m2 into a joint weight per layer; fold 1/sqrt(N) into the m1
    # half of the last layer (exact: no activation after the last Linear).
    wk_list, b_rows = [], []
    for i in range(L):
        W1, b1_ = m1_params[i]
        W2, b2_ = m2_params[i]
        if i == L - 1:
            W1 = W1 * inv_norm
            b1_ = b1_ * inv_norm
        if i == 0:
            Wj = jnp.concatenate([W1, W2], axis=1)            # (Fin, 2C)
        else:
            z = jnp.zeros((C, C), f32)
            Wj = jnp.block([[W1, z], [z, W2]])                # (2C, 2C)
        wk_list.append(kron(Wj))                              # (din*N, 2C*N)
        bj = jnp.concatenate([b1_.reshape(-1), b2_.reshape(-1)]).astype(f32)
        b_rows.append(jnp.repeat(bj, N))                      # (2C*N,)
    b_all = jnp.stack(b_rows, axis=0)                         # (L, 2C*N)

    # Split of the final weight matches the concat order (matmul_out, x).
    W4a_k = kron(W4[:C])                                      # (C*N, C*N)
    W4b_k = kron(W4[C:])                                      # (Fin*N, C*N)
    b4_row = jnp.repeat(b4.reshape(-1).astype(f32), N)[None, :]   # (1, C*N)

    # Block-diagonal channel mask: mask[c, k, c'*N + j] = [c == c'].
    mask3 = (jnp.arange(C)[:, None, None] ==
             (jnp.arange(C * N) // N)[None, None, :])
    mask3 = jnp.broadcast_to(mask3, (C, N, C * N)).astype(f32)

    # Wrapper-side layout plumbing: x -> (B*N, Fin*N), lane index = f*N + j.
    x_wide = jnp.transpose(x.astype(f32), (0, 1, 3, 2)).reshape(B * N, Fin * N)

    Bblk = _pick_bblk(B)
    grid = (B // Bblk,)

    flat_params = wk_list + [b_all, W4a_k, W4b_k, b4_row, mask3]

    def _const_spec(a):
        nd = a.ndim
        return pl.BlockSpec(a.shape, lambda g, _n=nd: (0,) * _n)

    out_wide = pl.pallas_call(
        _make_kernel(N, Fin, C, L, Bblk),
        grid=grid,
        in_specs=[pl.BlockSpec((Bblk * N, Fin * N), lambda g: (g, 0))]
                 + [_const_spec(p) for p in flat_params],
        out_specs=pl.BlockSpec((Bblk * N, C * N), lambda g: (g, 0)),
        out_shape=jax.ShapeDtypeStruct((B * N, C * N), jnp.float32),
        compiler_params=pltpu.CompilerParams(
            dimension_semantics=("parallel",)),
    )(x_wide, *flat_params)

    # Lane-dense kernel output -> (B, N, N, C): cheap XLA layout plumbing.
    return out_wide.reshape(B, N, C, N).transpose(0, 1, 3, 2)


# ----------------------------------------------------------------------------
# Plain-JAX reference (mirrors the PyTorch forward exactly) for verification.
# ----------------------------------------------------------------------------
def reference_forward(x, m1_params, m2_params, W4, b4):
    def mlp(h, params):
        for i, (W, b) in enumerate(params):
            h = h @ W + b
            if i != len(params) - 1:
                h = jnp.where(h >= 0, h, SLOPE * h)
        return h

    N = x.shape[1]
    out1 = jnp.transpose(mlp(x, m1_params), (0, 3, 1, 2))  # (B, C, N, N)
    out2 = jnp.transpose(mlp(x, m2_params), (0, 3, 1, 2))
    out = jnp.matmul(out1, out2) / (N ** 0.5)
    out = jnp.concatenate([jnp.transpose(out, (0, 2, 3, 1)), x], axis=3)
    return out @ W4 + b4


if __name__ == "__main__":
    B, N, Fin, C, num_layers = 2, 16, 8, 16, 2

    key = jax.random.PRNGKey(0)
    k_x, k_p = jax.random.split(key)
    x = jax.random.normal(k_x, (B, N, N, Fin), jnp.float32)

    def init_linear(k, din, dout):
        kw, kb = jax.random.split(k)
        W = jax.random.normal(kw, (din, dout), jnp.float32) * 0.1
        b = jax.random.normal(kb, (1, dout), jnp.float32) * 0.1
        return W, b

    pkeys = jax.random.split(k_p, 2 * num_layers + 1)
    m1_params, m2_params = [], []
    for i in range(num_layers):
        din = Fin if i == 0 else C
        m1_params.append(init_linear(pkeys[i], din, C))
        m2_params.append(init_linear(pkeys[num_layers + i], din, C))
    W4, b4 = init_linear(pkeys[-1], C + Fin, C)   # concat dim = out_feat + in_feat

    out = powerful_layer(x, m1_params, m2_params, W4, b4)
    out = jax.block_until_ready(out)

    ref = reference_forward(x, m1_params, m2_params, W4, b4)
    assert out.shape == (B, N, N, C)
    err = float(jnp.max(jnp.abs(out - ref)))
    # Tolerance covers TPU default matmul precision and reordered accumulation.
    assert jnp.allclose(out, ref, rtol=2e-3, atol=2e-3), err

    print("KERNEL_OK")
</pallas_src>

<mosaic_0001>
module attributes {stable_mosaic.version = 11 : i64} {
  func.func @kernel(%arg0: i32, %arg1: memref<32x128xf32, #tpu.memory_space<vmem>>, %arg2: memref<128x512xf32, #tpu.memory_space<vmem>>, %arg3: memref<512x512xf32, #tpu.memory_space<vmem>>, %arg4: memref<2x512xf32, #tpu.memory_space<vmem>>, %arg5: memref<256x256xf32, #tpu.memory_space<vmem>>, %arg6: memref<128x256xf32, #tpu.memory_space<vmem>>, %arg7: memref<1x256xf32, #tpu.memory_space<vmem>>, %arg8: memref<16x16x256xf32, #tpu.memory_space<vmem>>, %arg9: memref<32x256xf32, #tpu.memory_space<vmem>>) attributes {dimension_semantics = [#tpu.dimension_semantics<parallel>], iteration_bounds = array<i64: 1>, scalar_prefetch = 0 : i64, scratch_operands = 0 : i64, tpu.core_type = #tpu.core_type<tc>, window_params = [{transform_indices = @transform_0, window_bounds = array<i64: 32, 128>}, {pipeline_mode = #tpu.pipeline_mode<synchronous>, transform_indices = @transform_1, window_bounds = array<i64: 128, 512>}, {pipeline_mode = #tpu.pipeline_mode<synchronous>, transform_indices = @transform_2, window_bounds = array<i64: 512, 512>}, {pipeline_mode = #tpu.pipeline_mode<synchronous>, transform_indices = @transform_3, window_bounds = array<i64: 2, 512>}, {pipeline_mode = #tpu.pipeline_mode<synchronous>, transform_indices = @transform_4, window_bounds = array<i64: 256, 256>}, {pipeline_mode = #tpu.pipeline_mode<synchronous>, transform_indices = @transform_5, window_bounds = array<i64: 128, 256>}, {pipeline_mode = #tpu.pipeline_mode<synchronous>, transform_indices = @transform_6, window_bounds = array<i64: 1, 256>}, {pipeline_mode = #tpu.pipeline_mode<synchronous>, transform_indices = @transform_7, window_bounds = array<i64: 16, 16, 256>}, {transform_indices = @transform_8, window_bounds = array<i64: 32, 256>}]} {
    %c0 = arith.constant 0 : index
    %c0_0 = arith.constant 0 : index
    %0 = vector.load %arg4[%c0, %c0_0] : memref<2x512xf32, #tpu.memory_space<vmem>>, vector<2x512xf32>
    %c0_1 = arith.constant 0 : index
    %c0_2 = arith.constant 0 : index
    %1 = vector.load %arg5[%c0_1, %c0_2] : memref<256x256xf32, #tpu.memory_space<vmem>>, vector<256x256xf32>
    %c0_3 = arith.constant 0 : index
    %c0_4 = arith.constant 0 : index
    %2 = vector.load %arg6[%c0_3, %c0_4] : memref<128x256xf32, #tpu.memory_space<vmem>>, vector<128x256xf32>
    %c0_5 = arith.constant 0 : index
    %c0_6 = arith.constant 0 : index
    %3 = vector.load %arg7[%c0_5, %c0_6] : memref<1x256xf32, #tpu.memory_space<vmem>>, vector<1x256xf32>
    %c0_7 = arith.constant 0 : index
    %c0_8 = arith.constant 0 : index
    %c0_9 = arith.constant 0 : index
    %4 = vector.load %arg8[%c0_7, %c0_8, %c0_9] : memref<16x16x256xf32, #tpu.memory_space<vmem>>, vector<16x16x256xf32>
    %c0_10 = arith.constant 0 : index
    %c0_11 = arith.constant 0 : index
    %5 = vector.load %arg1[%c0_10, %c0_11] : memref<32x128xf32, #tpu.memory_space<vmem>>, vector<32x128xf32>
    %c0_12 = arith.constant 0 : index
    %c0_13 = arith.constant 0 : index
    %6 = vector.load %arg2[%c0_12, %c0_13] : memref<128x512xf32, #tpu.memory_space<vmem>>, vector<128x512xf32>
    %cst = arith.constant dense<0.000000e+00> : vector<32x512xf32>
    %7 = tpu.matmul %5, %6, %cst {dimension_numbers = #tpu.dot_dimension_numbers<[1], [0], [0], [1], [0, 0, 1, 1], [], []>} : vector<32x128xf32>, vector<128x512xf32>, vector<32x512xf32> -> vector<32x512xf32>
    %8 = vector.extract_strided_slice %0 {offsets = [0, 0], sizes = [1, 512], strides = [1, 1]} : vector<2x512xf32> to vector<1x512xf32>
    %9 = vector.broadcast %8 : vector<1x512xf32> to vector<32x512xf32>
    %10 = arith.addf %7, %9 : vector<32x512xf32>
    %cst_14 = arith.constant 0.000000e+00 : f32
    %11 = vector.broadcast %cst_14 : f32 to vector<32x512xf32>
    %12 = arith.cmpf oge, %10, %11 : vector<32x512xf32>
    %cst_15 = arith.constant 0.00999999977 : f32
    %13 = vector.broadcast %cst_15 : f32 to vector<32x512xf32>
    %14 = arith.mulf %13, %10 : vector<32x512xf32>
    %15 = arith.select %12, %10, %14 : vector<32x512xi1>, vector<32x512xf32>
    %c0_16 = arith.constant 0 : index
    %c0_17 = arith.constant 0 : index
    %16 = vector.load %arg3[%c0_16, %c0_17] : memref<512x512xf32, #tpu.memory_space<vmem>>, vector<512x512xf32>
    %cst_18 = arith.constant dense<0.000000e+00> : vector<32x512xf32>
    %17 = tpu.matmul %15, %16, %cst_18 {dimension_numbers = #tpu.dot_dimension_numbers<[1], [0], [0], [1], [0, 0, 1, 1], [], []>} : vector<32x512xf32>, vector<512x512xf32>, vector<32x512xf32> -> vector<32x512xf32>
    %18 = vector.extract_strided_slice %0 {offsets = [1, 0], sizes = [1, 512], strides = [1, 1]} : vector<2x512xf32> to vector<1x512xf32>
    %19 = vector.broadcast %18 : vector<1x512xf32> to vector<32x512xf32>
    %20 = arith.addf %17, %19 : vector<32x512xf32>
    %21 = vector.extract_strided_slice %20 {offsets = [0, 0], sizes = [32, 256], strides = [1, 1]} : vector<32x512xf32> to vector<32x256xf32>
    %22 = vector.shape_cast %21 : vector<32x256xf32> to vector<2x16x256xf32>
    %23 = vector.extract_strided_slice %20 {offsets = [0, 256], sizes = [32, 256], strides = [1, 1]} : vector<32x512xf32> to vector<32x256xf32>
    %24 = vector.shape_cast %23 : vector<32x256xf32> to vector<2x16x256xf32>
    %25 = vector.shape_cast %24 : vector<2x16x256xf32> to vector<2x1x16x256xf32>
    %26 = vector.shape_cast %4 : vector<16x16x256xf32> to vector<1x16x16x256xf32>
    %27 = vector.broadcast %25 : vector<2x1x16x256xf32> to vector<2x16x16x256xf32>
    %28 = vector.broadcast %26 : vector<1x16x16x256xf32> to vector<2x16x16x256xf32>
    %29 = arith.mulf %27, %28 : vector<2x16x16x256xf32>
    %30 = vector.shape_cast %29 : vector<2x16x16x256xf32> to vector<2x256x256xf32>
    "tpu.trace_start"() <{level = 10 : i32, message = "bik,bkj->bij"}> : () -> ()
    %cst_19 = arith.constant dense<0.000000e+00> : vector<2x16x256xf32>
    %31 = tpu.matmul %22, %30, %cst_19 {dimension_numbers = #tpu.dot_dimension_numbers<[2], [1], [1], [2], [0, 0, 0, 1, 1, 2], [0], [0]>} : vector<2x16x256xf32>, vector<2x256x256xf32>, vector<2x16x256xf32> -> vector<2x16x256xf32>
    "tpu.trace_stop"() : () -> ()
    %32 = vector.shape_cast %31 : vector<2x16x256xf32> to vector<32x256xf32>
    %cst_20 = arith.constant dense<0.000000e+00> : vector<32x256xf32>
    %33 = tpu.matmul %32, %1, %cst_20 {dimension_numbers = #tpu.dot_dimension_numbers<[1], [0], [0], [1], [0, 0, 1, 1], [], []>} : vector<32x256xf32>, vector<256x256xf32>, vector<32x256xf32> -> vector<32x256xf32>
    %cst_21 = arith.constant dense<0.000000e+00> : vector<32x256xf32>
    %34 = tpu.matmul %5, %2, %cst_21 {dimension_numbers = #tpu.dot_dimension_numbers<[1], [0], [0], [1], [0, 0, 1, 1], [], []>} : vector<32x128xf32>, vector<128x256xf32>, vector<32x256xf32> -> vector<32x256xf32>
    %35 = arith.addf %33, %34 : vector<32x256xf32>
    %36 = vector.broadcast %3 : vector<1x256xf32> to vector<32x256xf32>
    %37 = arith.addf %35, %36 : vector<32x256xf32>
    %c0_22 = arith.constant 0 : index
    %c0_23 = arith.constant 0 : index
    %38 = vector.load %arg9[%c0_22, %c0_23] : memref<32x256xf32, #tpu.memory_space<vmem>>, vector<32x256xf32>
    tpu.vector_store %arg9[%c0_22, %c0_23], %37 {strides = array<i32>} : memref<32x256xf32, #tpu.memory_space<vmem>>, vector<32x256xf32>,
    return
  }
  func.func @transform_0(%arg0: i32) -> (i32, i32) {
    %c0_i32 = arith.constant 0 : i32
    %c0_i32_0 = arith.constant 0 : i32
    return %arg0, %c0_i32 : i32, i32
  }
  func.func @transform_1(%arg0: i32) -> (i32, i32) {
    %c0_i32 = arith.constant 0 : i32
    %c0_i32_0 = arith.constant 0 : i32
    %c0_i32_1 = arith.constant 0 : i32
    return %c0_i32, %c0_i32_0 : i32, i32
  }
  func.func @transform_2(%arg0: i32) -> (i32, i32) {
    %c0_i32 = arith.constant 0 : i32
    %c0_i32_0 = arith.constant 0 : i32
    %c0_i32_1 = arith.constant 0 : i32
    return %c0_i32, %c0_i32_0 : i32, i32
  }
  func.func @transform_3(%arg0: i32) -> (i32, i32) {
    %c0_i32 = arith.constant 0 : i32
    %c0_i32_0 = arith.constant 0 : i32
    %c0_i32_1 = arith.constant 0 : i32
    return %c0_i32, %c0_i32_0 : i32, i32
  }
  func.func @transform_4(%arg0: i32) -> (i32, i32) {
    %c0_i32 = arith.constant 0 : i32
    %c0_i32_0 = arith.constant 0 : i32
    %c0_i32_1 = arith.constant 0 : i32
    return %c0_i32, %c0_i32_0 : i32, i32
  }
  func.func @transform_5(%arg0: i32) -> (i32, i32) {
    %c0_i32 = arith.constant 0 : i32
    %c0_i32_0 = arith.constant 0 : i32
    %c0_i32_1 = arith.constant 0 : i32
    return %c0_i32, %c0_i32_0 : i32, i32
  }
  func.func @transform_6(%arg0: i32) -> (i32, i32) {
    %c0_i32 = arith.constant 0 : i32
    %c0_i32_0 = arith.constant 0 : i32
    %c0_i32_1 = arith.constant 0 : i32
    return %c0_i32, %c0_i32_0 : i32, i32
  }
  func.func @transform_7(%arg0: i32) -> (i32, i32, i32) {
    %c0_i32 = arith.constant 0 : i32
    %c0_i32_0 = arith.constant 0 : i32
    %c0_i32_1 = arith.constant 0 : i32
    %c0_i32_2 = arith.constant 0 : i32
    return %c0_i32, %c0_i32_0, %c0_i32_1 : i32, i32, i32
  }
  func.func @transform_8(%arg0: i32) -> (i32, i32) {
    %c0_i32 = arith.constant 0 : i32
    %c0_i32_0 = arith.constant 0 : i32
    return %arg0, %c0_i32 : i32, i32
  }
}

</mosaic_0001>

<llo_original>
// kernel: tpu_custom_call.1
$region0: #{tpu_custom_call.1}
  #allocation0 [shape = 'u32[]', space=smem, size = 0x4, offset = 0x4, fixed_abs, tag = 'smem constant byte address 0x4 - core index']
  #allocation1 [shape = 'u32[144,128]{1,0:T(1,128)}', space=vmem, size = 0x12000, scoped, tag = 'internal scratch']
  %s0 = inlined_call_operand.hbm [shape: f32[32,128], index: 0, kind: input, shape index: {}]
  %s1 = inlined_call_operand.hbm [shape: f32[128,512], index: 1, kind: input, shape index: {}]
  %s2 = inlined_call_operand.hbm [shape: f32[512,512], index: 2, kind: input, shape index: {}]
  %s3 = inlined_call_operand.vmem [shape: f32[2,512], index: 3, kind: input, shape index: {}]
  %s4 = inlined_call_operand.hbm [shape: f32[256,256], index: 4, kind: input, shape index: {}]
  %s5 = inlined_call_operand.hbm [shape: f32[128,256], index: 5, kind: input, shape index: {}]
  %s6 = inlined_call_operand.vmem [shape: f32[1,256], index: 6, kind: input, shape index: {}]
  %s7 = inlined_call_operand.hbm [shape: f32[16,16,256], index: 7, kind: input, shape index: {}]
  %s8 = inlined_call_operand.hbm [shape: f32[32,256], index: 8, kind: output, shape index: {}]
  %s9 = sld [smem:[#allocation0]]
  $region66: #{tpu_custom_call.1} parent=0
    _
  %s11 = ssub.s32 1, %s9
  %s12 = scalar_select 0, %s11, %s9
  $region1: #{tpu_custom_call.1} parent=0
    #allocation2 [shape = 'u8[16384]{0}', space=vmem, size = 0x4000, scoped, tag = 'input window, operand 0, single buffered']
    #allocation3 [shape = 's32[1]{0}', space=sflag, size = 0x4, scoped, tag = 'scoped memory for tpu_custom_call.1']
    #allocation4 [shape = 's32[1]{0}', space=sflag, size = 0x4, scoped, tag = 'scoped memory for tpu_custom_call.1']
    #allocation5 [shape = 'u8[262144]{0}', space=vmem, size = 0x40000, scoped, tag = 'input window, operand 1, single buffered']
    #allocation6 [shape = 's32[1]{0}', space=sflag, size = 0x4, scoped, tag = 'scoped memory for tpu_custom_call.1']
    #allocation7 [shape = 'u8[1048576]{0}', space=vmem, size = 0x100000, scoped, tag = 'input window, operand 2, single buffered']
    #allocation8 [shape = 'u8[262144]{0}', space=vmem, size = 0x40000, scoped, tag = 'input window, operand 4, single buffered']
    #allocation9 [shape = 's32[1]{0}', space=sflag, size = 0x4, scoped, tag = 'scoped memory for tpu_custom_call.1']
    #allocation10 [shape = 'u8[131072]{0}', space=vmem, size = 0x20000, scoped, tag = 'input window, operand 5, single buffered']
    #allocation11 [shape = 'u8[262144]{0}', space=vmem, size = 0x40000, scoped, tag = 'input window, operand 7, single buffered']
    #allocation12 [shape = 's32[1]{0}', space=sflag, size = 0x4, scoped, tag = 'scoped memory for tpu_custom_call.1']
    #allocation13 [shape = 'u8[32768]{0}', space=vmem, size = 0x8000, scoped, tag = 'output window, operand 0, single buffered']
    %13 = vsyncpa [#allocation3], 0
    %14 = vsyncpa [#allocation6], 0
    %15 = vsyncpa [#allocation9], 0
    %16 = vsyncpa [#allocation12], 0
    %17 = vsyncpa [#allocation4], 0
    // Predicated region
    $region2: #{tpu_custom_call.1} parent=1 // pred_check
      _
    $region3: #{tpu_custom_call.1} parent=1 // pred_check_branch
      %19 = sbr.rel (0) target = $region5
    $region4: #{tpu_custom_call.1} parent=1 // pred_region
      %s21 = ssub.s32 512, 512
      %22 = vsyncadd [#allocation3], %s21
      %s23 = sshll.u32 [#allocation2], 4
      %s24 = int_to_ptr.vmem [resolvable:$true] %s23
      %29 = dma.hbm_to_vmem [thread:$0]  %s0, 512, %s24, [#allocation3], 128, 128, 8
    $region5: #{tpu_custom_call.1} parent=1 // pred_fallthru
      _
    // Predicated region
    $region6: #{tpu_custom_call.1} parent=1 // pred_check
      _
    $region7: #{tpu_custom_call.1} parent=1 // pred_check_branch
      %31 = sbr.rel (0) target = $region9
    $region8: #{tpu_custom_call.1} parent=1 // pred_region
      %s33 = ssub.s32 8192, 8192
      %34 = vsyncadd [#allocation6], %s33
      %s35 = sshll.u32 [#allocation5], 4
      %s36 = int_to_ptr.vmem [resolvable:$true] %s35
      %41 = dma.hbm_to_vmem [thread:$0]  %s1, 8192, %s36, [#allocation6], 512, 512, 32
    $region9: #{tpu_custom_call.1} parent=1 // pred_fallthru
      _
    // Predicated region
    $region10: #{tpu_custom_call.1} parent=1 // pred_check
      _
    $region11: #{tpu_custom_call.1} parent=1 // pred_check_branch
      %43 = sbr.rel (0) target = $region13
    $region12: #{tpu_custom_call.1} parent=1 // pred_region
      %s45 = ssub.s32 32768, 32768
      %46 = vsyncadd [#allocation6], %s45
      %s47 = sshll.u32 [#allocation7], 4
      %s48 = int_to_ptr.vmem [resolvable:$true] %s47
      %53 = dma.hbm_to_vmem [thread:$0]  %s2, 32768, %s48, [#allocation6], 512, 512, 32
    $region13: #{tpu_custom_call.1} parent=1 // pred_fallthru
      _
    // Predicated region
    $region14: #{tpu_custom_call.1} parent=1 // pred_check
      _
    $region15: #{tpu_custom_call.1} parent=1 // pred_check_branch
      %55 = sbr.rel (0) target = $region17
    $region16: #{tpu_custom_call.1} parent=1 // pred_region
      _
    $region17: #{tpu_custom_call.1} parent=1 // pred_fallthru
      _
    // Predicated region
    $region18: #{tpu_custom_call.1} parent=1 // pred_check
      _
    $region19: #{tpu_custom_call.1} parent=1 // pred_check_branch
      %57 = sbr.rel (0) target = $region21
    $region20: #{tpu_custom_call.1} parent=1 // pred_region
      %s59 = ssub.s32 8192, 8192
      %60 = vsyncadd [#allocation9], %s59
      %s61 = sshll.u32 [#allocation8], 4
      %s62 = int_to_ptr.vmem [resolvable:$true] %s61
      %67 = dma.hbm_to_vmem [thread:$0]  %s4, 8192, %s62, [#allocation9], 256, 256, 16
    $region21: #{tpu_custom_call.1} parent=1 // pred_fallthru
      _
    // Predicated region
    $region22: #{tpu_custom_call.1} parent=1 // pred_check
      _
    $region23: #{tpu_custom_call.1} parent=1 // pred_check_branch
      %69 = sbr.rel (0) target = $region25
    $region24: #{tpu_custom_call.1} parent=1 // pred_region
      %s71 = ssub.s32 4096, 4096
      %72 = vsyncadd [#allocation9], %s71
      %s73 = sshll.u32 [#allocation10], 4
      %s74 = int_to_ptr.vmem [resolvable:$true] %s73
      %79 = dma.hbm_to_vmem [thread:$0]  %s5, 4096, %s74, [#allocation9], 256, 256, 16
    $region25: #{tpu_custom_call.1} parent=1 // pred_fallthru
      _
    // Predicated region
    $region26: #{tpu_custom_call.1} parent=1 // pred_check
      _
    $region27: #{tpu_custom_call.1} parent=1 // pred_check_branch
      %81 = sbr.rel (0) target = $region29
    $region28: #{tpu_custom_call.1} parent=1 // pred_region
      _
    $region29: #{tpu_custom_call.1} parent=1 // pred_fallthru
      _
    // Predicated region
    $region30: #{tpu_custom_call.1} parent=1 // pred_check
      _
    $region31: #{tpu_custom_call.1} parent=1 // pred_check_branch
      %83 = sbr.rel (0) target = $region33
    $region32: #{tpu_custom_call.1} parent=1 // pred_region
      %s85 = ssub.s32 8192, 8192
      %86 = vsyncadd [#allocation12], %s85
      %s87 = sshll.u32 [#allocation11], 4
      %s88 = int_to_ptr.vmem [resolvable:$true] %s87
      %93 = dma.hbm_to_vmem [thread:$0]  %s7, 8192, %s88, [#allocation12], 256, 256, 16
    $region33: #{tpu_custom_call.1} parent=1 // pred_fallthru
      _
    // Predicated region
    $region34: #{tpu_custom_call.1} parent=1 // pred_check
      _
    $region35: #{tpu_custom_call.1} parent=1 // pred_check_branch
      %95 = sbr.rel (0) target = $region37
    $region36: #{tpu_custom_call.1} parent=1 // pred_region
      %96 = dma.done [#allocation3], 512
    $region37: #{tpu_custom_call.1} parent=1 // pred_fallthru
      _
    // Predicated region
    $region38: #{tpu_custom_call.1} parent=1 // pred_check
      _
    $region39: #{tpu_custom_call.1} parent=1 // pred_check_branch
      %98 = sbr.rel (0) target = $region41
    $region40: #{tpu_custom_call.1} parent=1 // pred_region
      %99 = dma.done [#allocation6], 8192
    $region41: #{tpu_custom_call.1} parent=1 // pred_fallthru
      _
    // Predicated region
    $region42: #{tpu_custom_call.1} parent=1 // pred_check
      _
    $region43: #{tpu_custom_call.1} parent=1 // pred_check_branch
      %101 = sbr.rel (0) target = $region45
    $region44: #{tpu_custom_call.1} parent=1 // pred_region
      %102 = dma.done [#allocation6], 32768
    $region45: #{tpu_custom_call.1} parent=1 // pred_fallthru
      _
    // Predicated region
    $region46: #{tpu_custom_call.1} parent=1 // pred_check
      _
    $region47: #{tpu_custom_call.1} parent=1 // pred_check_branch
      %104 = sbr.rel (0) target = $region49
    $region48: #{tpu_custom_call.1} parent=1 // pred_region
      %105 = dma.done [#allocation9], 8192
    $region49: #{tpu_custom_call.1} parent=1 // pred_fallthru
      _
    // Predicated region
    $region50: #{tpu_custom_call.1} parent=1 // pred_check
      _
    $region51: #{tpu_custom_call.1} parent=1 // pred_check_branch
      %107 = sbr.rel (0) target = $region53
    $region52: #{tpu_custom_call.1} parent=1 // pred_region
      %108 = dma.done [#allocation9], 4096
    $region53: #{tpu_custom_call.1} parent=1 // pred_fallthru
      _
    // Predicated region
    $region54: #{tpu_custom_call.1} parent=1 // pred_check
      _
    $region55: #{tpu_custom_call.1} parent=1 // pred_check_branch
      %110 = sbr.rel (0) target = $region57
    $region56: #{tpu_custom_call.1} parent=1 // pred_region
      %111 = dma.done [#allocation12], 8192
    $region57: #{tpu_custom_call.1} parent=1 // pred_fallthru
      _
    %v112 = vld [vmem:[%s3] sm:$0xff]
    %v113 = vld [vmem:[#allocation8] sm:$0xff]
    %v114 = vld [vmem:[#allocation8 + $0x8] sm:$0xff]
    %v115 = vld [vmem:[#allocation8 + $0x10] sm:$0xff]
    %v116 = vld [vmem:[#allocation8 + $0x18] sm:$0xff]
    %v117 = vld [vmem:[#allocation8 + $0x20] sm:$0xff]
    %v118 = vld [vmem:[#allocation8 + $0x28] sm:$0xff]
    %v119 = vld [vmem:[#allocation8 + $0x30] sm:$0xff]
    %v120 = vld [vmem:[#allocation8 + $0x38] sm:$0xff]
    %v121 = vld [vmem:[#allocation8 + $0x40] sm:$0xff]
    %v122 = vld [vmem:[#allocation8 + $0x48] sm:$0xff]
    %v123 = vld [vmem:[#allocation8 + $0x50] sm:$0xff]
    %v124 = vld [vmem:[#allocation8 + $0x58] sm:$0xff]
    %v125 = vld [vmem:[#allocation8 + $0x60] sm:$0xff]
    %v126 = vld [vmem:[#allocation8 + $0x68] sm:$0xff]
    %v127 = vld [vmem:[#allocation8 + $0x70] sm:$0xff]
    %v128 = vld [vmem:[#allocation8 + $0x78] sm:$0xff]
    %v129 = vld [vmem:[#allocation8 + $0x80] sm:$0xff]
    %v130 = vld [vmem:[#allocation8 + $0x88] sm:$0xff]
    %v131 = vld [vmem:[#allocation8 + $0x90] sm:$0xff]
    %v132 = vld [vmem:[#allocation8 + $0x98] sm:$0xff]
    %v133 = vld [vmem:[#allocation8 + $0xa0] sm:$0xff]
    %v134 = vld [vmem:[#allocation8 + $0xa8] sm:$0xff]
    %v135 = vld [vmem:[#allocation8 + $0xb0] sm:$0xff]
    %v136 = vld [vmem:[#allocation8 + $0xb8] sm:$0xff]
    %v137 = vld [vmem:[#allocation8 + $0xc0] sm:$0xff]
    %v138 = vld [vmem:[#allocation8 + $0xc8] sm:$0xff]
    %v139 = vld [vmem:[#allocation8 + $0xd0] sm:$0xff]
    %v140 = vld [vmem:[#allocation8 + $0xd8] sm:$0xff]
    %v141 = vld [vmem:[#allocation8 + $0xe0] sm:$0xff]
    %v142 = vld [vmem:[#allocation8 + $0xe8] sm:$0xff]
    %v143 = vld [vmem:[#allocation8 + $0xf0] sm:$0xff]
    %v144 = vld [vmem:[#allocation8 + $0xf8] sm:$0xff]
    %v145 = vld [vmem:[#allocation8 + $0x100] sm:$0xff]
    %v146 = vld [vmem:[#allocation8 + $0x108] sm:$0xff]
    %v147 = vld [vmem:[#allocation8 + $0x110] sm:$0xff]
    %v148 = vld [vmem:[#allocation8 + $0x118] sm:$0xff]
    %v149 = vld [vmem:[#allocation8 + $0x120] sm:$0xff]
    %v150 = vld [vmem:[#allocation8 + $0x128] sm:$0xff]
    %v151 = vld [vmem:[#allocation8 + $0x130] sm:$0xff]
    %v152 = vld [vmem:[#allocation8 + $0x138] sm:$0xff]
    %v153 = vld [vmem:[#allocation8 + $0x140] sm:$0xff]
    %v154 = vld [vmem:[#allocation8 + $0x148] sm:$0xff]
    %v155 = vld [vmem:[#allocation8 + $0x150] sm:$0xff]
    %v156 = vld [vmem:[#allocation8 + $0x158] sm:$0xff]
    %v157 = vld [vmem:[#allocation8 + $0x160] sm:$0xff]
    %v158 = vld [vmem:[#allocation8 + $0x168] sm:$0xff]
    %v159 = vld [vmem:[#allocation8 + $0x170] sm:$0xff]
    %v160 = vld [vmem:[#allocation8 + $0x178] sm:$0xff]
    %v161 = vld [vmem:[#allocation8 + $0x180] sm:$0xff]
    %v162 = vld [vmem:[#allocation8 + $0x188] sm:$0xff]
    %v163 = vld [vmem:[#allocation8 + $0x190] sm:$0xff]
    %v164 = vld [vmem:[#allocation8 + $0x198] sm:$0xff]
    %v165 = vld [vmem:[#allocation8 + $0x1a0] sm:$0xff]
    %v166 = vld [vmem:[#allocation8 + $0x1a8] sm:$0xff]
    %v167 = vld [vmem:[#allocation8 + $0x1b0] sm:$0xff]
    %v168 = vld [vmem:[#allocation8 + $0x1b8] sm:$0xff]
    %v169 = vld [vmem:[#allocation8 + $0x1c0] sm:$0xff]
    %v170 = vld [vmem:[#allocation8 + $0x1c8] sm:$0xff]
    %v171 = vld [vmem:[#allocation8 + $0x1d0] sm:$0xff]
    %v172 = vld [vmem:[#allocation8 + $0x1d8] sm:$0xff]
    %v173 = vld [vmem:[#allocation8 + $0x1e0] sm:$0xff]
    %v174 = vld [vmem:[#allocation8 + $0x1e8] sm:$0xff]
    %v175 = vld [vmem:[#allocation8 + $0x1f0] sm:$0xff]
    %v176 = vld [vmem:[#allocation8 + $0x1f8] sm:$0xff]
    %v177 = vld [vmem:[#allocation10] sm:$0xff]
    %v178 = vld [vmem:[#allocation10 + $0x8] sm:$0xff]
    %v179 = vld [vmem:[#allocation10 + $0x10] sm:$0xff]
    %v180 = vld [vmem:[#allocation10 + $0x18] sm:$0xff]
    %v181 = vld [vmem:[#allocation10 + $0x20] sm:$0xff]
    %v182 = vld [vmem:[#allocation10 + $0x28] sm:$0xff]
    %v183 = vld [vmem:[#allocation10 + $0x30] sm:$0xff]
    %v184 = vld [vmem:[#allocation10 + $0x38] sm:$0xff]
    %v185 = vld [vmem:[#allocation10 + $0x40] sm:$0xff]
    %v186 = vld [vmem:[#allocation10 + $0x48] sm:$0xff]
    %v187 = vld [vmem:[#allocation10 + $0x50] sm:$0xff]
    %v188 = vld [vmem:[#allocation10 + $0x58] sm:$0xff]
    %v189 = vld [vmem:[#allocation10 + $0x60] sm:$0xff]
    %v190 = vld [vmem:[#allocation10 + $0x68] sm:$0xff]
    %v191 = vld [vmem:[#allocation10 + $0x70] sm:$0xff]
    %v192 = vld [vmem:[#allocation10 + $0x78] sm:$0xff]
    %v193 = vld [vmem:[#allocation10 + $0x80] sm:$0xff]
    %v194 = vld [vmem:[#allocation10 + $0x88] sm:$0xff]
    %v195 = vld [vmem:[#allocation10 + $0x90] sm:$0xff]
    %v196 = vld [vmem:[#allocation10 + $0x98] sm:$0xff]
    %v197 = vld [vmem:[#allocation10 + $0xa0] sm:$0xff]
    %v198 = vld [vmem:[#allocation10 + $0xa8] sm:$0xff]
    %v199 = vld [vmem:[#allocation10 + $0xb0] sm:$0xff]
    %v200 = vld [vmem:[#allocation10 + $0xb8] sm:$0xff]
    %v201 = vld [vmem:[#allocation10 + $0xc0] sm:$0xff]
    %v202 = vld [vmem:[#allocation10 + $0xc8] sm:$0xff]
    %v203 = vld [vmem:[#allocation10 + $0xd0] sm:$0xff]
    %v204 = vld [vmem:[#allocation10 + $0xd8] sm:$0xff]
    %v205 = vld [vmem:[#allocation10 + $0xe0] sm:$0xff]
    %v206 = vld [vmem:[#allocation10 + $0xe8] sm:$0xff]
    %v207 = vld [vmem:[#allocation10 + $0xf0] sm:$0xff]
    %v208 = vld [vmem:[#allocation10 + $0xf8] sm:$0xff]
    %v209 = vld [vmem:[%s6] sm:$0x3]
    %v210 = vld [vmem:[#allocation11] sm:$0xff]
    %v211 = vld [vmem:[#allocation11 + $0x8] sm:$0xff]
    %v212 = vld [vmem:[#allocation11 + $0x10] sm:$0xff]
    %v213 = vld [vmem:[#allocation11 + $0x18] sm:$0xff]
    %v214 = vld [vmem:[#allocation11 + $0x20] sm:$0xff]
    %v215 = vld [vmem:[#allocation11 + $0x28] sm:$0xff]
    %v216 = vld [vmem:[#allocation11 + $0x30] sm:$0xff]
    %v217 = vld [vmem:[#allocation11 + $0x38] sm:$0xff]
    %v218 = vld [vmem:[#allocation11 + $0x40] sm:$0xff]
    %v219 = vld [vmem:[#allocation11 + $0x48] sm:$0xff]
    %v220 = vld [vmem:[#allocation11 + $0x50] sm:$0xff]
    %v221 = vld [vmem:[#allocation11 + $0x58] sm:$0xff]
    %v222 = vld [vmem:[#allocation11 + $0x60] sm:$0xff]
    %v223 = vld [vmem:[#allocation11 + $0x68] sm:$0xff]
    %v224 = vld [vmem:[#allocation11 + $0x70] sm:$0xff]
    %v225 = vld [vmem:[#allocation11 + $0x78] sm:$0xff]
    %v226 = vld [vmem:[#allocation11 + $0x80] sm:$0xff]
    %v227 = vld [vmem:[#allocation11 + $0x88] sm:$0xff]
    %v228 = vld [vmem:[#allocation11 + $0x90] sm:$0xff]
    %v229 = vld [vmem:[#allocation11 + $0x98] sm:$0xff]
    %v230 = vld [vmem:[#allocation11 + $0xa0] sm:$0xff]
    %v231 = vld [vmem:[#allocation11 + $0xa8] sm:$0xff]
    %v232 = vld [vmem:[#allocation11 + $0xb0] sm:$0xff]
    %v233 = vld [vmem:[#allocation11 + $0xb8] sm:$0xff]
    %v234 = vld [vmem:[#allocation11 + $0xc0] sm:$0xff]
    %v235 = vld [vmem:[#allocation11 + $0xc8] sm:$0xff]
    %v236 = vld [vmem:[#allocation11 + $0xd0] sm:$0xff]
    %v237 = vld [vmem:[#allocation11 + $0xd8] sm:$0xff]
    %v238 = vld [vmem:[#allocation11 + $0xe0] sm:$0xff]
    %v239 = vld [vmem:[#allocation11 + $0xe8] sm:$0xff]
    %v240 = vld [vmem:[#allocation11 + $0xf0] sm:$0xff]
    %v241 = vld [vmem:[#allocation11 + $0xf8] sm:$0xff]
    %v242 = vld [vmem:[#allocation11 + $0x100] sm:$0xff]
    %v243 = vld [vmem:[#allocation11 + $0x108] sm:$0xff]
    %v244 = vld [vmem:[#allocation11 + $0x110] sm:$0xff]
    %v245 = vld [vmem:[#allocation11 + $0x118] sm:$0xff]
    %v246 = vld [vmem:[#allocation11 + $0x120] sm:$0xff]
    %v247 = vld [vmem:[#allocation11 + $0x128] sm:$0xff]
    %v248 = vld [vmem:[#allocation11 + $0x130] sm:$0xff]
    %v249 = vld [vmem:[#allocation11 + $0x138] sm:$0xff]
    %v250 = vld [vmem:[#allocation11 + $0x140] sm:$0xff]
    %v251 = vld [vmem:[#allocation11 + $0x148] sm:$0xff]
    %v252 = vld [vmem:[#allocation11 + $0x150] sm:$0xff]
    %v253 = vld [vmem:[#allocation11 + $0x158] sm:$0xff]
    %v254 = vld [vmem:[#allocation11 + $0x160] sm:$0xff]
    %v255 = vld [vmem:[#allocation11 + $0x168] sm:$0xff]
    %v256 = vld [vmem:[#allocation11 + $0x170] sm:$0xff]
    %v257 = vld [vmem:[#allocation11 + $0x178] sm:$0xff]
    %v258 = vld [vmem:[#allocation11 + $0x180] sm:$0xff]
    %v259 = vld [vmem:[#allocation11 + $0x188] sm:$0xff]
    %v260 = vld [vmem:[#allocation11 + $0x190] sm:$0xff]
    %v261 = vld [vmem:[#allocation11 + $0x198] sm:$0xff]
    %v262 = vld [vmem:[#allocation11 + $0x1a0] sm:$0xff]
    %v263 = vld [vmem:[#allocation11 + $0x1a8] sm:$0xff]
    %v264 = vld [vmem:[#allocation11 + $0x1b0] sm:$0xff]
    %v265 = vld [vmem:[#allocation11 + $0x1b8] sm:$0xff]
    %v266 = vld [vmem:[#allocation11 + $0x1c0] sm:$0xff]
    %v267 = vld [vmem:[#allocation11 + $0x1c8] sm:$0xff]
    %v268 = vld [vmem:[#allocation11 + $0x1d0] sm:$0xff]
    %v269 = vld [vmem:[#allocation11 + $0x1d8] sm:$0xff]
    %v270 = vld [vmem:[#allocation11 + $0x1e0] sm:$0xff]
    %v271 = vld [vmem:[#allocation11 + $0x1e8] sm:$0xff]
    %v272 = vld [vmem:[#allocation11 + $0x1f0] sm:$0xff]
    %v273 = vld [vmem:[#allocation11 + $0x1f8] sm:$0xff]
    %v274 = vld [vmem:[#allocation2] sm:$0xff]
    %v275 = vld [vmem:[#allocation2 + $0x8] sm:$0xff]
    %v276 = vld [vmem:[#allocation2 + $0x10] sm:$0xff]
    %v277 = vld [vmem:[#allocation2 + $0x18] sm:$0xff]
    %v278 = vld [vmem:[#allocation5] sm:$0xff]
    %v279 = vld [vmem:[#allocation5 + $0x8] sm:$0xff]
    %v280 = vld [vmem:[#allocation5 + $0x10] sm:$0xff]
    %v281 = vld [vmem:[#allocation5 + $0x18] sm:$0xff]
    %v282 = vld [vmem:[#allocation5 + $0x20] sm:$0xff]
    %v283 = vld [vmem:[#allocation5 + $0x28] sm:$0xff]
    %v284 = vld [vmem:[#allocation5 + $0x30] sm:$0xff]
    %v285 = vld [vmem:[#allocation5 + $0x38] sm:$0xff]
    %v286 = vld [vmem:[#allocation5 + $0x40] sm:$0xff]
    %v287 = vld [vmem:[#allocation5 + $0x48] sm:$0xff]
    %v288 = vld [vmem:[#allocation5 + $0x50] sm:$0xff]
    %v289 = vld [vmem:[#allocation5 + $0x58] sm:$0xff]
    %v290 = vld [vmem:[#allocation5 + $0x60] sm:$0xff]
    %v291 = vld [vmem:[#allocation5 + $0x68] sm:$0xff]
    %v292 = vld [vmem:[#allocation5 + $0x70] sm:$0xff]
    %v293 = vld [vmem:[#allocation5 + $0x78] sm:$0xff]
    %v294 = vld [vmem:[#allocation5 + $0x80] sm:$0xff]
    %v295 = vld [vmem:[#allocation5 + $0x88] sm:$0xff]
    %v296 = vld [vmem:[#allocation5 + $0x90] sm:$0xff]
    %v297 = vld [vmem:[#allocation5 + $0x98] sm:$0xff]
    %v298 = vld [vmem:[#allocation5 + $0xa0] sm:$0xff]
    %v299 = vld [vmem:[#allocation5 + $0xa8] sm:$0xff]
    %v300 = vld [vmem:[#allocation5 + $0xb0] sm:$0xff]
    %v301 = vld [vmem:[#allocation5 + $0xb8] sm:$0xff]
    %v302 = vld [vmem:[#allocation5 + $0xc0] sm:$0xff]
    %v303 = vld [vmem:[#allocation5 + $0xc8] sm:$0xff]
    %v304 = vld [vmem:[#allocation5 + $0xd0] sm:$0xff]
    %v305 = vld [vmem:[#allocation5 + $0xd8] sm:$0xff]
    %v306 = vld [vmem:[#allocation5 + $0xe0] sm:$0xff]
    %v307 = vld [vmem:[#allocation5 + $0xe8] sm:$0xff]
    %v308 = vld [vmem:[#allocation5 + $0xf0] sm:$0xff]
    %v309 = vld [vmem:[#allocation5 + $0xf8] sm:$0xff]
    %v310 = vld [vmem:[#allocation5 + $0x100] sm:$0xff]
    %v311 = vld [vmem:[#allocation5 + $0x108] sm:$0xff]
    %v312 = vld [vmem:[#allocation5 + $0x110] sm:$0xff]
    %v313 = vld [vmem:[#allocation5 + $0x118] sm:$0xff]
    %v314 = vld [vmem:[#allocation5 + $0x120] sm:$0xff]
    %v315 = vld [vmem:[#allocation5 + $0x128] sm:$0xff]
    %v316 = vld [vmem:[#allocation5 + $0x130] sm:$0xff]
    %v317 = vld [vmem:[#allocation5 + $0x138] sm:$0xff]
    %v318 = vld [vmem:[#allocation5 + $0x140] sm:$0xff]
    %v319 = vld [vmem:[#allocation5 + $0x148] sm:$0xff]
    %v320 = vld [vmem:[#allocation5 + $0x150] sm:$0xff]
    %v321 = vld [vmem:[#allocation5 + $0x158] sm:$0xff]
    %v322 = vld [vmem:[#allocation5 + $0x160] sm:$0xff]
    %v323 = vld [vmem:[#allocation5 + $0x168] sm:$0xff]
    %v324 = vld [vmem:[#allocation5 + $0x170] sm:$0xff]
    %v325 = vld [vmem:[#allocation5 + $0x178] sm:$0xff]
    %v326 = vld [vmem:[#allocation5 + $0x180] sm:$0xff]
    %v327 = vld [vmem:[#allocation5 + $0x188] sm:$0xff]
    %v328 = vld [vmem:[#allocation5 + $0x190] sm:$0xff]
    %v329 = vld [vmem:[#allocation5 + $0x198] sm:$0xff]
    %v330 = vld [vmem:[#allocation5 + $0x1a0] sm:$0xff]
    %v331 = vld [vmem:[#allocation5 + $0x1a8] sm:$0xff]
    %v332 = vld [vmem:[#allocation5 + $0x1b0] sm:$0xff]
    %v333 = vld [vmem:[#allocation5 + $0x1b8] sm:$0xff]
    %v334 = vld [vmem:[#allocation5 + $0x1c0] sm:$0xff]
    %v335 = vld [vmem:[#allocation5 + $0x1c8] sm:$0xff]
    %v336 = vld [vmem:[#allocation5 + $0x1d0] sm:$0xff]
    %v337 = vld [vmem:[#allocation5 + $0x1d8] sm:$0xff]
    %v338 = vld [vmem:[#allocation5 + $0x1e0] sm:$0xff]
    %v339 = vld [vmem:[#allocation5 + $0x1e8] sm:$0xff]
    %v340 = vld [vmem:[#allocation5 + $0x1f0] sm:$0xff]
    %v341 = vld [vmem:[#allocation5 + $0x1f8] sm:$0xff]
    %v343 = vlaneseq
    %v344 = vshrl.u32 %v343, 7
    %v345 = vsub.s32 0, %v344
    %v346 = vrot.slane %v112, %v345
    %v347 = vlaneseq
    %v348 = vshrl.u32 %v347, 7
    %v349 = vsub.s32 2, %v348
    %v350 = vrot.slane %v112, %v349
    %v351 = vlaneseq
    %v352 = vshrl.u32 %v351, 7
    %v353 = vsub.s32 4, %v352
    %v354 = vrot.slane %v112, %v353
    %v355 = vlaneseq
    %v356 = vshrl.u32 %v355, 7
    %v357 = vsub.s32 6, %v356
    %v358 = vrot.slane %v112, %v357
    %v363 = vlaneseq
    %v364 = vshrl.u32 %v363, 7
    %v365 = vsub.s32 0, %v364
    %v366 = vrot.slane %v346, %v365
    %v367 = vlaneseq
    %v368 = vshrl.u32 %v367, 7
    %v369 = vsub.s32 0, %v368
    %v370 = vrot.slane %v350, %v369
    %v371 = vlaneseq
    %v372 = vshrl.u32 %v371, 7
    %v373 = vsub.s32 0, %v372
    %v374 = vrot.slane %v354, %v373
    %v375 = vlaneseq
    %v376 = vshrl.u32 %v375, 7
    %v377 = vsub.s32 0, %v376
    %v378 = vrot.slane %v358, %v377
    %379 = vmatprep.subr.mxu0 %v279
    %380 = vmatpush1.msra.mxu0 %v278
    %381 = vmatprep.subr.mxu0 %v283
    %382 = vmatpush1.msra.mxu0 %v282
    %383 = vmatprep.subr.mxu0 %v287
    %384 = vmatpush1.msra.mxu0 %v286
    %385 = vmatprep.subr.mxu0 %v291
    %386 = vmatpush1.msra.mxu0 %v290
    %387 = vmatprep.subr.mxu0 %v295
    %388 = vmatpush1.msra.mxu0 %v294
    %389 = vmatprep.subr.mxu0 %v299
    %390 = vmatpush1.msra.mxu0 %v298
    %391 = vmatprep.subr.mxu0 %v303
    %392 = vmatpush1.msra.mxu0 %v302
    %393 = vmatprep.subr.mxu0 %v307
    %394 = vmatpush1.msra.mxu0 %v306
    %395 = vmatprep.subr.mxu0 %v311
    %396 = vmatpush1.msra.mxu0 %v310
    %397 = vmatprep.subr.mxu0 %v315
    %398 = vmatpush1.msra.mxu0 %v314
    %399 = vmatprep.subr.mxu0 %v319
    %400 = vmatpush1.msra.mxu0 %v318
    %401 = vmatprep.subr.mxu0 %v323
    %402 = vmatpush1.msra.mxu0 %v322
    %403 = vmatprep.subr.mxu0 %v327
    %404 = vmatpush1.msra.mxu0 %v326
    %405 = vmatprep.subr.mxu0 %v331
    %406 = vmatpush1.msra.mxu0 %v330
    %407 = vmatprep.subr.mxu0 %v335
    %408 = vmatpush1.msra.mxu0 %v334
    %409 = vmatprep.subr.mxu0 %v339
    %410 = vmatpush1.msra.mxu0 %v338
    %411 = vmatprep.subr.mxu0 0.0
    %412 = vmatpush1.msra.mxu0 0.0
    %413 = vmatprep.subr.mxu0 0.0
    %414 = vmatpush1.msra.mxu0 0.0
    %415 = vmatprep.subr.mxu0 0.0
    %416 = vmatpush1.msra.mxu0 0.0
    %417 = vmatprep.subr.mxu0 0.0
    %418 = vmatpush1.msra.mxu0 0.0
    %419 = vmatprep.subr.mxu0 0.0
    %420 = vmatpush1.msra.mxu0 0.0
    %421 = vmatprep.subr.mxu0 0.0
    %422 = vmatpush1.msra.mxu0 0.0
    %423 = vmatprep.subr.mxu0 0.0
    %424 = vmatpush1.msra.mxu0 0.0
    %425 = vmatprep.subr.mxu0 0.0
    %426 = vmatpush1.msra.mxu0 0.0
    %427 = vmatprep.subr.mxu0 0.0
    %428 = vmatpush1.msra.mxu0 0.0
    %429 = vmatprep.subr.mxu0 0.0
    %430 = vmatpush1.msra.mxu0 0.0
    %431 = vmatprep.subr.mxu0 0.0
    %432 = vmatpush1.msra.mxu0 0.0
    %433 = vmatprep.subr.mxu0 0.0
    %434 = vmatpush1.msra.mxu0 0.0
    %435 = vmatprep.subr.mxu0 0.0
    %436 = vmatpush1.msra.mxu0 0.0
    %437 = vmatprep.subr.mxu0 0.0
    %438 = vmatpush1.msra.mxu0 0.0
    %439 = vmatprep.subr.mxu0 0.0
    %440 = vmatpush1.msra.mxu0 0.0
    %441 = vmatprep.subr.mxu0 0.0
    %442 = vmatpush1.msra.mxu0 0.0
    %443 = vmatprep.mubr.f32.mxu0 0.0
    %444 = vmatmul.mubr.f32.gmra.mrb[0].mxu0 %v274
    %v445 = vpop.f32.mrb[0].mxu0
    %v446 = vadd.f32 %v366, %v445
    %v447 = vpop.f32.mrb[0].mxu0
    %v448 = vadd.f32 %v370, %v447
    %449 = vmatprep.mubr.f32.mxu0 0.0
    %450 = vmatmul.mubr.f32.gmra.mrb[0].mxu0 %v275
    %v451 = vpop.f32.mrb[0].mxu0
    %v452 = vadd.f32 %v366, %v451
    %v453 = vpop.f32.mrb[0].mxu0
    %v454 = vadd.f32 %v370, %v453
    %455 = vmatprep.mubr.f32.mxu0 0.0
    %456 = vmatmul.mubr.f32.gmra.mrb[0].mxu0 %v276
    %v457 = vpop.f32.mrb[0].mxu0
    %v458 = vadd.f32 %v366, %v457
    %v459 = vpop.f32.mrb[0].mxu0
    %v460 = vadd.f32 %v370, %v459
    %461 = vmatprep.mubr.f32.mxu0 0.0
    %462 = vmatmul.mubr.f32.gmra.mrb[0].mxu0 %v277
    %v463 = vpop.f32.mrb[0].mxu0
    %v464 = vadd.f32 %v366, %v463
    %v465 = vpop.f32.mrb[0].mxu0
    %v466 = vadd.f32 %v370, %v465
    %467 = vdwg.mxu0
    %468 = vmatprep.subr.mxu0 %v281
    %469 = vmatpush1.msra.mxu0 %v280
    %470 = vmatprep.subr.mxu0 %v285
    %471 = vmatpush1.msra.mxu0 %v284
    %472 = vmatprep.subr.mxu0 %v289
    %473 = vmatpush1.msra.mxu0 %v288
    %474 = vmatprep.subr.mxu0 %v293
    %475 = vmatpush1.msra.mxu0 %v292
    %476 = vmatprep.subr.mxu0 %v297
    %477 = vmatpush1.msra.mxu0 %v296
    %478 = vmatprep.subr.mxu0 %v301
    %479 = vmatpush1.msra.mxu0 %v300
    %480 = vmatprep.subr.mxu0 %v305
    %481 = vmatpush1.msra.mxu0 %v304
    %482 = vmatprep.subr.mxu0 %v309
    %483 = vmatpush1.msra.mxu0 %v308
    %484 = vmatprep.subr.mxu0 %v313
    %485 = vmatpush1.msra.mxu0 %v312
    %486 = vmatprep.subr.mxu0 %v317
    %487 = vmatpush1.msra.mxu0 %v316
    %488 = vmatprep.subr.mxu0 %v321
    %489 = vmatpush1.msra.mxu0 %v320
    %490 = vmatprep.subr.mxu0 %v325
    %491 = vmatpush1.msra.mxu0 %v324
    %492 = vmatprep.subr.mxu0 %v329
    %493 = vmatpush1.msra.mxu0 %v328
    %494 = vmatprep.subr.mxu0 %v333
    %495 = vmatpush1.msra.mxu0 %v332
    %496 = vmatprep.subr.mxu0 %v337
    %497 = vmatpush1.msra.mxu0 %v336
    %498 = vmatprep.subr.mxu0 %v341
    %499 = vmatpush1.msra.mxu0 %v340
    %500 = vmatprep.subr.mxu0 0.0
    %501 = vmatpush1.msra.mxu0 0.0
    %502 = vmatprep.subr.mxu0 0.0
    %503 = vmatpush1.msra.mxu0 0.0
    %504 = vmatprep.subr.mxu0 0.0
    %505 = vmatpush1.msra.mxu0 0.0
    %506 = vmatprep.subr.mxu0 0.0
    %507 = vmatpush1.msra.mxu0 0.0
    %508 = vmatprep.subr.mxu0 0.0
    %509 = vmatpush1.msra.mxu0 0.0
    %510 = vmatprep.subr.mxu0 0.0
    %511 = vmatpush1.msra.mxu0 0.0
    %512 = vmatprep.subr.mxu0 0.0
    %513 = vmatpush1.msra.mxu0 0.0
    %514 = vmatprep.subr.mxu0 0.0
    %515 = vmatpush1.msra.mxu0 0.0
    %516 = vmatprep.subr.mxu0 0.0
    %517 = vmatpush1.msra.mxu0 0.0
    %518 = vmatprep.subr.mxu0 0.0
    %519 = vmatpush1.msra.mxu0 0.0
    %520 = vmatprep.subr.mxu0 0.0
    %521 = vmatpush1.msra.mxu0 0.0
    %522 = vmatprep.subr.mxu0 0.0
    %523 = vmatpush1.msra.mxu0 0.0
    %524 = vmatprep.subr.mxu0 0.0
    %525 = vmatpush1.msra.mxu0 0.0
    %526 = vmatprep.subr.mxu0 0.0
    %527 = vmatpush1.msra.mxu0 0.0
    %528 = vmatprep.subr.mxu0 0.0
    %529 = vmatpush1.msra.mxu0 0.0
    %530 = vmatprep.subr.mxu0 0.0
    %531 = vmatpush1.msra.mxu0 0.0
    %532 = vmatprep.mubr.f32.mxu0 0.0
    %533 = vmatmul.mubr.f32.gmra.mrb[0].mxu0 %v274
    %v534 = vpop.f32.mrb[0].mxu0
    %v535 = vadd.f32 %v374, %v534
    %v536 = vpop.f32.mrb[0].mxu0
    %v537 = vadd.f32 %v378, %v536
    %538 = vmatprep.mubr.f32.mxu0 0.0
    %539 = vmatmul.mubr.f32.gmra.mrb[0].mxu0 %v275
    %v540 = vpop.f32.mrb[0].mxu0
    %v541 = vadd.f32 %v374, %v540
    %v542 = vpop.f32.mrb[0].mxu0
    %v543 = vadd.f32 %v378, %v542
    %544 = vmatprep.mubr.f32.mxu0 0.0
    %545 = vmatmul.mubr.f32.gmra.mrb[0].mxu0 %v276
    %v546 = vpop.f32.mrb[0].mxu0
    %v547 = vadd.f32 %v374, %v546
    %v548 = vpop.f32.mrb[0].mxu0
    %v549 = vadd.f32 %v378, %v548
    %550 = vmatprep.mubr.f32.mxu0 0.0
    %551 = vmatmul.mubr.f32.gmra.mrb[0].mxu0 %v277
    %v552 = vpop.f32.mrb[0].mxu0
    %v553 = vadd.f32 %v374, %v552
    %v554 = vpop.f32.mrb[0].mxu0
    %v555 = vadd.f32 %v378, %v554
    %556 = vdwg.mxu0
    %vm557 = vcmp.ge.f32.partialorder %v446, 0.0
    %vm558 = vcmp.ge.f32.partialorder %v448, 0.0
    %vm559 = vcmp.ge.f32.partialorder %v535, 0.0
    %vm560 = vcmp.ge.f32.partialorder %v537, 0.0
    %vm561 = vcmp.ge.f32.partialorder %v452, 0.0
    %vm562 = vcmp.ge.f32.partialorder %v454, 0.0
    %vm563 = vcmp.ge.f32.partialorder %v541, 0.0
    %vm564 = vcmp.ge.f32.partialorder %v543, 0.0
    %vm565 = vcmp.ge.f32.partialorder %v458, 0.0
    %vm566 = vcmp.ge.f32.partialorder %v460, 0.0
    %vm567 = vcmp.ge.f32.partialorder %v547, 0.0
    %vm568 = vcmp.ge.f32.partialorder %v549, 0.0
    %vm569 = vcmp.ge.f32.partialorder %v464, 0.0
    %vm570 = vcmp.ge.f32.partialorder %v466, 0.0
    %vm571 = vcmp.ge.f32.partialorder %v553, 0.0
    %vm572 = vcmp.ge.f32.partialorder %v555, 0.0
    %v573 = vmul.f32 %v446, 0.01
    %v574 = vmul.f32 %v448, 0.01
    %v575 = vmul.f32 %v535, 0.01
    %v576 = vmul.f32 %v537, 0.01
    %v577 = vmul.f32 %v452, 0.01
    %v578 = vmul.f32 %v454, 0.01
    %v579 = vmul.f32 %v541, 0.01
    %v580 = vmul.f32 %v543, 0.01
    %v581 = vmul.f32 %v458, 0.01
    %v582 = vmul.f32 %v460, 0.01
    %v583 = vmul.f32 %v547, 0.01
    %v584 = vmul.f32 %v549, 0.01
    %v585 = vmul.f32 %v464, 0.01
    %v586 = vmul.f32 %v466, 0.01
    %v587 = vmul.f32 %v553, 0.01
    %v588 = vmul.f32 %v555, 0.01
    %v589 = vsel %vm557, %v446, %v573
    %v590 = vsel %vm558, %v448, %v574
    %v591 = vsel %vm559, %v535, %v575
    %v592 = vsel %vm560, %v537, %v576
    %v593 = vsel %vm561, %v452, %v577
    %v594 = vsel %vm562, %v454, %v578
    %v595 = vsel %vm563, %v541, %v579
    %v596 = vsel %vm564, %v543, %v580
    %v597 = vsel %vm565, %v458, %v581
    %v598 = vsel %vm566, %v460, %v582
    %v599 = vsel %vm567, %v547, %v583
    %v600 = vsel %vm568, %v549, %v584
    %v601 = vsel %vm569, %v464, %v585
    %v602 = vsel %vm570, %v466, %v586
    %v603 = vsel %vm571, %v553, %v587
    %v604 = vsel %vm572, %v555, %v588
    %v605 = vld [vmem:[#allocation7] sm:$0xff]
    %v606 = vld [vmem:[#allocation7 + $0x8] sm:$0xff]
    %v607 = vld [vmem:[#allocation7 + $0x10] sm:$0xff]
    %v608 = vld [vmem:[#allocation7 + $0x18] sm:$0xff]
    %v609 = vld [vmem:[#allocation7 + $0x20] sm:$0xff]
    %v610 = vld [vmem:[#allocation7 + $0x28] sm:$0xff]
    %v611 = vld [vmem:[#allocation7 + $0x30] sm:$0xff]
    %v612 = vld [vmem:[#allocation7 + $0x38] sm:$0xff]
    %v613 = vld [vmem:[#allocation7 + $0x40] sm:$0xff]
    %v614 = vld [vmem:[#allocation7 + $0x48] sm:$0xff]
    %v615 = vld [vmem:[#allocation7 + $0x50] sm:$0xff]
    %v616 = vld [vmem:[#allocation7 + $0x58] sm:$0xff]
    %v617 = vld [vmem:[#allocation7 + $0x60] sm:$0xff]
    %v618 = vld [vmem:[#allocation7 + $0x68] sm:$0xff]
    %v619 = vld [vmem:[#allocation7 + $0x70] sm:$0xff]
    %v620 = vld [vmem:[#allocation7 + $0x78] sm:$0xff]
    %v621 = vld [vmem:[#allocation7 + $0x80] sm:$0xff]
    %v622 = vld [vmem:[#allocation7 + $0x88] sm:$0xff]
    %v623 = vld [vmem:[#allocation7 + $0x90] sm:$0xff]
    %v624 = vld [vmem:[#allocation7 + $0x98] sm:$0xff]
    %v625 = vld [vmem:[#allocation7 + $0xa0] sm:$0xff]
    %v626 = vld [vmem:[#allocation7 + $0xa8] sm:$0xff]
    %v627 = vld [vmem:[#allocation7 + $0xb0] sm:$0xff]
    %v628 = vld [vmem:[#allocation7 + $0xb8] sm:$0xff]
    %v629 = vld [vmem:[#allocation7 + $0xc0] sm:$0xff]
    %v630 = vld [vmem:[#allocation7 + $0xc8] sm:$0xff]
    %v631 = vld [vmem:[#allocation7 + $0xd0] sm:$0xff]
    %v632 = vld [vmem:[#allocation7 + $0xd8] sm:$0xff]
    %v633 = vld [vmem:[#allocation7 + $0xe0] sm:$0xff]
    %v634 = vld [vmem:[#allocation7 + $0xe8] sm:$0xff]
    %v635 = vld [vmem:[#allocation7 + $0xf0] sm:$0xff]
    %v636 = vld [vmem:[#allocation7 + $0xf8] sm:$0xff]
    %v637 = vld [vmem:[#allocation7 + $0x100] sm:$0xff]
    %v638 = vld [vmem:[#allocation7 + $0x108] sm:$0xff]
    %v639 = vld [vmem:[#allocation7 + $0x110] sm:$0xff]
    %v640 = vld [vmem:[#allocation7 + $0x118] sm:$0xff]
    %v641 = vld [vmem:[#allocation7 + $0x120] sm:$0xff]
    %v642 = vld [vmem:[#allocation7 + $0x128] sm:$0xff]
    %v643 = vld [vmem:[#allocation7 + $0x130] sm:$0xff]
    %v644 = vld [vmem:[#allocation7 + $0x138] sm:$0xff]
    %v645 = vld [vmem:[#allocation7 + $0x140] sm:$0xff]
    %v646 = vld [vmem:[#allocation7 + $0x148] sm:$0xff]
    %v647 = vld [vmem:[#allocation7 + $0x150] sm:$0xff]
    %v648 = vld [vmem:[#allocation7 + $0x158] sm:$0xff]
    %v649 = vld [vmem:[#allocation7 + $0x160] sm:$0xff]
    %v650 = vld [vmem:[#allocation7 + $0x168] sm:$0xff]
    %v651 = vld [vmem:[#allocation7 + $0x170] sm:$0xff]
    %v652 = vld [vmem:[#allocation7 + $0x178] sm:$0xff]
    %v653 = vld [vmem:[#allocation7 + $0x180] sm:$0xff]
    %v654 = vld [vmem:[#allocation7 + $0x188] sm:$0xff]
    %v655 = vld [vmem:[#allocation7 + $0x190] sm:$0xff]
    %v656 = vld [vmem:[#allocation7 + $0x198] sm:$0xff]
    %v657 = vld [vmem:[#allocation7 + $0x1a0] sm:$0xff]
    %v658 = vld [vmem:[#allocation7 + $0x1a8] sm:$0xff]
    %v659 = vld [vmem:[#allocation7 + $0x1b0] sm:$0xff]
    %v660 = vld [vmem:[#allocation7 + $0x1b8] sm:$0xff]
    %v661 = vld [vmem:[#allocation7 + $0x1c0] sm:$0xff]
    %v662 = vld [vmem:[#allocation7 + $0x1c8] sm:$0xff]
    %v663 = vld [vmem:[#allocation7 + $0x1d0] sm:$0xff]
    %v664 = vld [vmem:[#allocation7 + $0x1d8] sm:$0xff]
    %v665 = vld [vmem:[#allocation7 + $0x1e0] sm:$0xff]
    %v666 = vld [vmem:[#allocation7 + $0x1e8] sm:$0xff]
    %v667 = vld [vmem:[#allocation7 + $0x1f0] sm:$0xff]
    %v668 = vld [vmem:[#allocation7 + $0x1f8] sm:$0xff]
    %v669 = vld [vmem:[#allocation7 + $0x200] sm:$0xff]
    %v670 = vld [vmem:[#allocation7 + $0x208] sm:$0xff]
    %v671 = vld [vmem:[#allocation7 + $0x210] sm:$0xff]
    %v672 = vld [vmem:[#allocation7 + $0x218] sm:$0xff]
    %v673 = vld [vmem:[#allocation7 + $0x220] sm:$0xff]
    %v674 = vld [vmem:[#allocation7 + $0x228] sm:$0xff]
    %v675 = vld [vmem:[#allocation7 + $0x230] sm:$0xff]
    %v676 = vld [vmem:[#allocation7 + $0x238] sm:$0xff]
    %v677 = vld [vmem:[#allocation7 + $0x240] sm:$0xff]
    %v678 = vld [vmem:[#allocation7 + $0x248] sm:$0xff]
    %v679 = vld [vmem:[#allocation7 + $0x250] sm:$0xff]
    %v680 = vld [vmem:[#allocation7 + $0x258] sm:$0xff]
    %v681 = vld [vmem:[#allocation7 + $0x260] sm:$0xff]
    %v682 = vld [vmem:[#allocation7 + $0x268] sm:$0xff]
    %v683 = vld [vmem:[#allocation7 + $0x270] sm:$0xff]
    %v684 = vld [vmem:[#allocation7 + $0x278] sm:$0xff]
    %v685 = vld [vmem:[#allocation7 + $0x280] sm:$0xff]
    %v686 = vld [vmem:[#allocation7 + $0x288] sm:$0xff]
    %v687 = vld [vmem:[#allocation7 + $0x290] sm:$0xff]
    %v688 = vld [vmem:[#allocation7 + $0x298] sm:$0xff]
    %v689 = vld [vmem:[#allocation7 + $0x2a0] sm:$0xff]
    %v690 = vld [vmem:[#allocation7 + $0x2a8] sm:$0xff]
    %v691 = vld [vmem:[#allocation7 + $0x2b0] sm:$0xff]
    %v692 = vld [vmem:[#allocation7 + $0x2b8] sm:$0xff]
    %v693 = vld [vmem:[#allocation7 + $0x2c0] sm:$0xff]
    %v694 = vld [vmem:[#allocation7 + $0x2c8] sm:$0xff]
    %v695 = vld [vmem:[#allocation7 + $0x2d0] sm:$0xff]
    %v696 = vld [vmem:[#allocation7 + $0x2d8] sm:$0xff]
    %v697 = vld [vmem:[#allocation7 + $0x2e0] sm:$0xff]
    %v698 = vld [vmem:[#allocation7 + $0x2e8] sm:$0xff]
    %v699 = vld [vmem:[#allocation7 + $0x2f0] sm:$0xff]
    %v700 = vld [vmem:[#allocation7 + $0x2f8] sm:$0xff]
    %v701 = vld [vmem:[#allocation7 + $0x300] sm:$0xff]
    %v702 = vld [vmem:[#allocation7 + $0x308] sm:$0xff]
    %v703 = vld [vmem:[#allocation7 + $0x310] sm:$0xff]
    %v704 = vld [vmem:[#allocation7 + $0x318] sm:$0xff]
    %v705 = vld [vmem:[#allocation7 + $0x320] sm:$0xff]
    %v706 = vld [vmem:[#allocation7 + $0x328] sm:$0xff]
    %v707 = vld [vmem:[#allocation7 + $0x330] sm:$0xff]
    %v708 = vld [vmem:[#allocation7 + $0x338] sm:$0xff]
    %v709 = vld [vmem:[#allocation7 + $0x340] sm:$0xff]
    %v710 = vld [vmem:[#allocation7 + $0x348] sm:$0xff]
    %v711 = vld [vmem:[#allocation7 + $0x350] sm:$0xff]
    %v712 = vld [vmem:[#allocation7 + $0x358] sm:$0xff]
    %v713 = vld [vmem:[#allocation7 + $0x360] sm:$0xff]
    %v714 = vld [vmem:[#allocation7 + $0x368] sm:$0xff]
    %v715 = vld [vmem:[#allocation7 + $0x370] sm:$0xff]
    %v716 = vld [vmem:[#allocation7 + $0x378] sm:$0xff]
    %v717 = vld [vmem:[#allocation7 + $0x380] sm:$0xff]
    %v718 = vld [vmem:[#allocation7 + $0x388] sm:$0xff]
    %v719 = vld [vmem:[#allocation7 + $0x390] sm:$0xff]
    %v720 = vld [vmem:[#allocation7 + $0x398] sm:$0xff]
    %v721 = vld [vmem:[#allocation7 + $0x3a0] sm:$0xff]
    %v722 = vld [vmem:[#allocation7 + $0x3a8] sm:$0xff]
    %v723 = vld [vmem:[#allocation7 + $0x3b0] sm:$0xff]
    %v724 = vld [vmem:[#allocation7 + $0x3b8] sm:$0xff]
    %v725 = vld [vmem:[#allocation7 + $0x3c0] sm:$0xff]
    %v726 = vld [vmem:[#allocation7 + $0x3c8] sm:$0xff]
    %v727 = vld [vmem:[#allocation7 + $0x3d0] sm:$0xff]
    %v728 = vld [vmem:[#allocation7 + $0x3d8] sm:$0xff]
    %v729 = vld [vmem:[#allocation7 + $0x3e0] sm:$0xff]
    %v730 = vld [vmem:[#allocation7 + $0x3e8] sm:$0xff]
    %v731 = vld [vmem:[#allocation7 + $0x3f0] sm:$0xff]
    %v732 = vld [vmem:[#allocation7 + $0x3f8] sm:$0xff]
    %v733 = vld [vmem:[#allocation7 + $0x400] sm:$0xff]
    %v734 = vld [vmem:[#allocation7 + $0x408] sm:$0xff]
    %v735 = vld [vmem:[#allocation7 + $0x410] sm:$0xff]
    %v736 = vld [vmem:[#allocation7 + $0x418] sm:$0xff]
    %v737 = vld [vmem:[#allocation7 + $0x420] sm:$0xff]
    %v738 = vld [vmem:[#allocation7 + $0x428] sm:$0xff]
    %v739 = vld [vmem:[#allocation7 + $0x430] sm:$0xff]
    %v740 = vld [vmem:[#allocation7 + $0x438] sm:$0xff]
    %v741 = vld [vmem:[#allocation7 + $0x440] sm:$0xff]
    %v742 = vld [vmem:[#allocation7 + $0x448] sm:$0xff]
    %v743 = vld [vmem:[#allocation7 + $0x450] sm:$0xff]
    %v744 = vld [vmem:[#allocation7 + $0x458] sm:$0xff]
    %v745 = vld [vmem:[#allocation7 + $0x460] sm:$0xff]
    %v746 = vld [vmem:[#allocation7 + $0x468] sm:$0xff]
    %v747 = vld [vmem:[#allocation7 + $0x470] sm:$0xff]
    %v748 = vld [vmem:[#allocation7 + $0x478] sm:$0xff]
    %v749 = vld [vmem:[#allocation7 + $0x480] sm:$0xff]
    %v750 = vld [vmem:[#allocation7 + $0x488] sm:$0xff]
    %v751 = vld [vmem:[#allocation7 + $0x490] sm:$0xff]
    %v752 = vld [vmem:[#allocation7 + $0x498] sm:$0xff]
    %v753 = vld [vmem:[#allocation7 + $0x4a0] sm:$0xff]
    %v754 = vld [vmem:[#allocation7 + $0x4a8] sm:$0xff]
    %v755 = vld [vmem:[#allocation7 + $0x4b0] sm:$0xff]
    %v756 = vld [vmem:[#allocation7 + $0x4b8] sm:$0xff]
    %v757 = vld [vmem:[#allocation7 + $0x4c0] sm:$0xff]
    %v758 = vld [vmem:[#allocation7 + $0x4c8] sm:$0xff]
    %v759 = vld [vmem:[#allocation7 + $0x4d0] sm:$0xff]
    %v760 = vld [vmem:[#allocation7 + $0x4d8] sm:$0xff]
    %v761 = vld [vmem:[#allocation7 + $0x4e0] sm:$0xff]
    %v762 = vld [vmem:[#allocation7 + $0x4e8] sm:$0xff]
    %v763 = vld [vmem:[#allocation7 + $0x4f0] sm:$0xff]
    %v764 = vld [vmem:[#allocation7 + $0x4f8] sm:$0xff]
    %v765 = vld [vmem:[#allocation7 + $0x500] sm:$0xff]
    %v766 = vld [vmem:[#allocation7 + $0x508] sm:$0xff]
    %v767 = vld [vmem:[#allocation7 + $0x510] sm:$0xff]
    %v768 = vld [vmem:[#allocation7 + $0x518] sm:$0xff]
    %v769 = vld [vmem:[#allocation7 + $0x520] sm:$0xff]
    %v770 = vld [vmem:[#allocation7 + $0x528] sm:$0xff]
    %v771 = vld [vmem:[#allocation7 + $0x530] sm:$0xff]
    %v772 = vld [vmem:[#allocation7 + $0x538] sm:$0xff]
    %v773 = vld [vmem:[#allocation7 + $0x540] sm:$0xff]
    %v774 = vld [vmem:[#allocation7 + $0x548] sm:$0xff]
    %v775 = vld [vmem:[#allocation7 + $0x550] sm:$0xff]
    %v776 = vld [vmem:[#allocation7 + $0x558] sm:$0xff]
    %v777 = vld [vmem:[#allocation7 + $0x560] sm:$0xff]
    %v778 = vld [vmem:[#allocation7 + $0x568] sm:$0xff]
    %v779 = vld [vmem:[#allocation7 + $0x570] sm:$0xff]
    %v780 = vld [vmem:[#allocation7 + $0x578] sm:$0xff]
    %v781 = vld [vmem:[#allocation7 + $0x580] sm:$0xff]
    %v782 = vld [vmem:[#allocation7 + $0x588] sm:$0xff]
    %v783 = vld [vmem:[#allocation7 + $0x590] sm:$0xff]
    %v784 = vld [vmem:[#allocation7 + $0x598] sm:$0xff]
    %v785 = vld [vmem:[#allocation7 + $0x5a0] sm:$0xff]
    %v786 = vld [vmem:[#allocation7 + $0x5a8] sm:$0xff]
    %v787 = vld [vmem:[#allocation7 + $0x5b0] sm:$0xff]
    %v788 = vld [vmem:[#allocation7 + $0x5b8] sm:$0xff]
    %v789 = vld [vmem:[#allocation7 + $0x5c0] sm:$0xff]
    %v790 = vld [vmem:[#allocation7 + $0x5c8] sm:$0xff]
    %v791 = vld [vmem:[#allocation7 + $0x5d0] sm:$0xff]
    %v792 = vld [vmem:[#allocation7 + $0x5d8] sm:$0xff]
    %v793 = vld [vmem:[#allocation7 + $0x5e0] sm:$0xff]
    %v794 = vld [vmem:[#allocation7 + $0x5e8] sm:$0xff]
    %v795 = vld [vmem:[#allocation7 + $0x5f0] sm:$0xff]
    %v796 = vld [vmem:[#allocation7 + $0x5f8] sm:$0xff]
    %v797 = vld [vmem:[#allocation7 + $0x600] sm:$0xff]
    %v798 = vld [vmem:[#allocation7 + $0x608] sm:$0xff]
    %v799 = vld [vmem:[#allocation7 + $0x610] sm:$0xff]
    %v800 = vld [vmem:[#allocation7 + $0x618] sm:$0xff]
    %v801 = vld [vmem:[#allocation7 + $0x620] sm:$0xff]
    %v802 = vld [vmem:[#allocation7 + $0x628] sm:$0xff]
    %v803 = vld [vmem:[#allocation7 + $0x630] sm:$0xff]
    %v804 = vld [vmem:[#allocation7 + $0x638] sm:$0xff]
    %v805 = vld [vmem:[#allocation7 + $0x640] sm:$0xff]
    %v806 = vld [vmem:[#allocation7 + $0x648] sm:$0xff]
    %v807 = vld [vmem:[#allocation7 + $0x650] sm:$0xff]
    %v808 = vld [vmem:[#allocation7 + $0x658] sm:$0xff]
    %v809 = vld [vmem:[#allocation7 + $0x660] sm:$0xff]
    %v810 = vld [vmem:[#allocation7 + $0x668] sm:$0xff]
    %v811 = vld [vmem:[#allocation7 + $0x670] sm:$0xff]
    %v812 = vld [vmem:[#allocation7 + $0x678] sm:$0xff]
    %v813 = vld [vmem:[#allocation7 + $0x680] sm:$0xff]
    %v814 = vld [vmem:[#allocation7 + $0x688] sm:$0xff]
    %v815 = vld [vmem:[#allocation7 + $0x690] sm:$0xff]
    %v816 = vld [vmem:[#allocation7 + $0x698] sm:$0xff]
    %v817 = vld [vmem:[#allocation7 + $0x6a0] sm:$0xff]
    %v818 = vld [vmem:[#allocation7 + $0x6a8] sm:$0xff]
    %v819 = vld [vmem:[#allocation7 + $0x6b0] sm:$0xff]
    %v820 = vld [vmem:[#allocation7 + $0x6b8] sm:$0xff]
    %v821 = vld [vmem:[#allocation7 + $0x6c0] sm:$0xff]
    %v822 = vld [vmem:[#allocation7 + $0x6c8] sm:$0xff]
    %v823 = vld [vmem:[#allocation7 + $0x6d0] sm:$0xff]
    %v824 = vld [vmem:[#allocation7 + $0x6d8] sm:$0xff]
    %v825 = vld [vmem:[#allocation7 + $0x6e0] sm:$0xff]
    %v826 = vld [vmem:[#allocation7 + $0x6e8] sm:$0xff]
    %v827 = vld [vmem:[#allocation7 + $0x6f0] sm:$0xff]
    %v828 = vld [vmem:[#allocation7 + $0x6f8] sm:$0xff]
    %v829 = vld [vmem:[#allocation7 + $0x700] sm:$0xff]
    %v830 = vld [vmem:[#allocation7 + $0x708] sm:$0xff]
    %v831 = vld [vmem:[#allocation7 + $0x710] sm:$0xff]
    %v832 = vld [vmem:[#allocation7 + $0x718] sm:$0xff]
    %v833 = vld [vmem:[#allocation7 + $0x720] sm:$0xff]
    %v834 = vld [vmem:[#allocation7 + $0x728] sm:$0xff]
    %v835 = vld [vmem:[#allocation7 + $0x730] sm:$0xff]
    %v836 = vld [vmem:[#allocation7 + $0x738] sm:$0xff]
    %v837 = vld [vmem:[#allocation7 + $0x740] sm:$0xff]
    %v838 = vld [vmem:[#allocation7 + $0x748] sm:$0xff]
    %v839 = vld [vmem:[#allocation7 + $0x750] sm:$0xff]
    %v840 = vld [vmem:[#allocation7 + $0x758] sm:$0xff]
    %v841 = vld [vmem:[#allocation7 + $0x760] sm:$0xff]
    %v842 = vld [vmem:[#allocation7 + $0x768] sm:$0xff]
    %v843 = vld [vmem:[#allocation7 + $0x770] sm:$0xff]
    %v844 = vld [vmem:[#allocation7 + $0x778] sm:$0xff]
    %v845 = vld [vmem:[#allocation7 + $0x780] sm:$0xff]
    %v846 = vld [vmem:[#allocation7 + $0x788] sm:$0xff]
    %v847 = vld [vmem:[#allocation7 + $0x790] sm:$0xff]
    %v848 = vld [vmem:[#allocation7 + $0x798] sm:$0xff]
    %v849 = vld [vmem:[#allocation7 + $0x7a0] sm:$0xff]
    %v850 = vld [vmem:[#allocation7 + $0x7a8] sm:$0xff]
    %v851 = vld [vmem:[#allocation7 + $0x7b0] sm:$0xff]
    %v852 = vld [vmem:[#allocation7 + $0x7b8] sm:$0xff]
    %v853 = vld [vmem:[#allocation7 + $0x7c0] sm:$0xff]
    %v854 = vld [vmem:[#allocation7 + $0x7c8] sm:$0xff]
    %v855 = vld [vmem:[#allocation7 + $0x7d0] sm:$0xff]
    %v856 = vld [vmem:[#allocation7 + $0x7d8] sm:$0xff]
    %v857 = vld [vmem:[#allocation7 + $0x7e0] sm:$0xff]
    %v858 = vld [vmem:[#allocation7 + $0x7e8] sm:$0xff]
    %v859 = vld [vmem:[#allocation7 + $0x7f0] sm:$0xff]
    %v860 = vld [vmem:[#allocation7 + $0x7f8] sm:$0xff]
    %v861 = vlaneseq
    %v862 = vshrl.u32 %v861, 7
    %v863 = vsub.s32 1, %v862
    %v864 = vrot.slane %v112, %v863
    %v865 = vlaneseq
    %v866 = vshrl.u32 %v865, 7
    %v867 = vsub.s32 3, %v866
    %v868 = vrot.slane %v112, %v867
    %v869 = vlaneseq
    %v870 = vshrl.u32 %v869, 7
    %v871 = vsub.s32 5, %v870
    %v872 = vrot.slane %v112, %v871
    %v873 = vlaneseq
    %v874 = vshrl.u32 %v873, 7
    %v875 = vsub.s32 7, %v874
    %v876 = vrot.slane %v112, %v875
    %v881 = vlaneseq
    %v882 = vshrl.u32 %v881, 7
    %v883 = vsub.s32 1, %v882
    %v884 = vrot.slane %v864, %v883
    %v885 = vlaneseq
    %v886 = vshrl.u32 %v885, 7
    %v887 = vsub.s32 1, %v886
    %v888 = vrot.slane %v868, %v887
    %v889 = vlaneseq
    %v890 = vshrl.u32 %v889, 7
    %v891 = vsub.s32 1, %v890
    %v892 = vrot.slane %v872, %v891
    %v893 = vlaneseq
    %v894 = vshrl.u32 %v893, 7
    %v895 = vsub.s32 1, %v894
    %v896 = vrot.slane %v876, %v895
    %897 = vmatprep.subr.mxu0 %v606
    %898 = vmatpush1.msra.mxu0 %v605
    %899 = vmatprep.subr.mxu0 %v610
    %900 = vmatpush1.msra.mxu0 %v609
    %901 = vmatprep.subr.mxu0 %v614
    %902 = vmatpush1.msra.mxu0 %v613
    %903 = vmatprep.subr.mxu0 %v618
    %904 = vmatpush1.msra.mxu0 %v617
    %905 = vmatprep.subr.mxu0 %v622
    %906 = vmatpush1.msra.mxu0 %v621
    %907 = vmatprep.subr.mxu0 %v626
    %908 = vmatpush1.msra.mxu0 %v625
    %909 = vmatprep.subr.mxu0 %v630
    %910 = vmatpush1.msra.mxu0 %v629
    %911 = vmatprep.subr.mxu0 %v634
    %912 = vmatpush1.msra.mxu0 %v633
    %913 = vmatprep.subr.mxu0 %v638
    %914 = vmatpush1.msra.mxu0 %v637
    %915 = vmatprep.subr.mxu0 %v642
    %916 = vmatpush1.msra.mxu0 %v641
    %917 = vmatprep.subr.mxu0 %v646
    %918 = vmatpush1.msra.mxu0 %v645
    %919 = vmatprep.subr.mxu0 %v650
    %920 = vmatpush1.msra.mxu0 %v649
    %921 = vmatprep.subr.mxu0 %v654
    %922 = vmatpush1.msra.mxu0 %v653
    %923 = vmatprep.subr.mxu0 %v658
    %924 = vmatpush1.msra.mxu0 %v657
    %925 = vmatprep.subr.mxu0 %v662
    %926 = vmatpush1.msra.mxu0 %v661
    %927 = vmatprep.subr.mxu0 %v666
    %928 = vmatpush1.msra.mxu0 %v665
    %929 = vmatprep.subr.mxu0 %v670
    %930 = vmatpush1.msra.mxu0 %v669
    %931 = vmatprep.subr.mxu0 %v674
    %932 = vmatpush1.msra.mxu0 %v673
    %933 = vmatprep.subr.mxu0 %v678
    %934 = vmatpush1.msra.mxu0 %v677
    %935 = vmatprep.subr.mxu0 %v682
    %936 = vmatpush1.msra.mxu0 %v681
    %937 = vmatprep.subr.mxu0 %v686
    %938 = vmatpush1.msra.mxu0 %v685
    %939 = vmatprep.subr.mxu0 %v690
    %940 = vmatpush1.msra.mxu0 %v689
    %941 = vmatprep.subr.mxu0 %v694
    %942 = vmatpush1.msra.mxu0 %v693
    %943 = vmatprep.subr.mxu0 %v698
    %944 = vmatpush1.msra.mxu0 %v697
    %945 = vmatprep.subr.mxu0 %v702
    %946 = vmatpush1.msra.mxu0 %v701
    %947 = vmatprep.subr.mxu0 %v706
    %948 = vmatpush1.msra.mxu0 %v705
    %949 = vmatprep.subr.mxu0 %v710
    %950 = vmatpush1.msra.mxu0 %v709
    %951 = vmatprep.subr.mxu0 %v714
    %952 = vmatpush1.msra.mxu0 %v713
    %953 = vmatprep.subr.mxu0 %v718
    %954 = vmatpush1.msra.mxu0 %v717
    %955 = vmatprep.subr.mxu0 %v722
    %956 = vmatpush1.msra.mxu0 %v721
    %957 = vmatprep.subr.mxu0 %v726
    %958 = vmatpush1.msra.mxu0 %v725
    %959 = vmatprep.subr.mxu0 %v730
    %960 = vmatpush1.msra.mxu0 %v729
    %961 = vmatprep.mubr.f32.mxu0 %v590
    %962 = vmatmul.mubr.f32.gmra.mrb[0].mxu0 %v589
    %v963 = vpop.f32.mrb[0].mxu0
    %v964 = vadd.f32 %v884, %v963
    %v965 = vpop.f32.mrb[0].mxu0
    %v966 = vadd.f32 %v888, %v965
    %967 = vmatprep.mubr.f32.mxu0 %v594
    %968 = vmatmul.mubr.f32.gmra.mrb[0].mxu0 %v593
    %v969 = vpop.f32.mrb[0].mxu0
    %v970 = vadd.f32 %v884, %v969
    %v971 = vpop.f32.mrb[0].mxu0
    %v972 = vadd.f32 %v888, %v971
    %973 = vmatprep.mubr.f32.mxu0 %v598
    %974 = vmatmul.mubr.f32.gmra.mrb[0].mxu0 %v597
    %v975 = vpop.f32.mrb[0].mxu0
    %v976 = vadd.f32 %v884, %v975
    %v977 = vpop.f32.mrb[0].mxu0
    %v978 = vadd.f32 %v888, %v977
    %979 = vmatprep.mubr.f32.mxu0 %v602
    %980 = vmatmul.mubr.f32.gmra.mrb[0].mxu0 %v601
    %v981 = vpop.f32.mrb[0].mxu0
    %v982 = vadd.f32 %v884, %v981
    %v983 = vpop.f32.mrb[0].mxu0
    %v984 = vadd.f32 %v888, %v983
    %985 = vdwg.mxu0
    %986 = vmatprep.subr.mxu0 %v734
    %987 = vmatpush1.msra.mxu0 %v733
    %988 = vmatprep.subr.mxu0 %v738
    %989 = vmatpush1.msra.mxu0 %v737
    %990 = vmatprep.subr.mxu0 %v742
    %991 = vmatpush1.msra.mxu0 %v741
    %992 = vmatprep.subr.mxu0 %v746
    %993 = vmatpush1.msra.mxu0 %v745
    %994 = vmatprep.subr.mxu0 %v750
    %995 = vmatpush1.msra.mxu0 %v749
    %996 = vmatprep.subr.mxu0 %v754
    %997 = vmatpush1.msra.mxu0 %v753
    %998 = vmatprep.subr.mxu0 %v758
    %999 = vmatpush1.msra.mxu0 %v757
    %1000 = vmatprep.subr.mxu0 %v762
    %1001 = vmatpush1.msra.mxu0 %v761
    %1002 = vmatprep.subr.mxu0 %v766
    %1003 = vmatpush1.msra.mxu0 %v765
    %1004 = vmatprep.subr.mxu0 %v770
    %1005 = vmatpush1.msra.mxu0 %v769
    %1006 = vmatprep.subr.mxu0 %v774
    %1007 = vmatpush1.msra.mxu0 %v773
    %1008 = vmatprep.subr.mxu0 %v778
    %1009 = vmatpush1.msra.mxu0 %v777
    %1010 = vmatprep.subr.mxu0 %v782
    %1011 = vmatpush1.msra.mxu0 %v781
    %1012 = vmatprep.subr.mxu0 %v786
    %1013 = vmatpush1.msra.mxu0 %v785
    %1014 = vmatprep.subr.mxu0 %v790
    %1015 = vmatpush1.msra.mxu0 %v789
    %1016 = vmatprep.subr.mxu0 %v794
    %1017 = vmatpush1.msra.mxu0 %v793
    %1018 = vmatprep.subr.mxu0 %v798
    %1019 = vmatpush1.msra.mxu0 %v797
    %1020 = vmatprep.subr.mxu0 %v802
    %1021 = vmatpush1.msra.mxu0 %v801
    %1022 = vmatprep.subr.mxu0 %v806
    %1023 = vmatpush1.msra.mxu0 %v805
    %1024 = vmatprep.subr.mxu0 %v810
    %1025 = vmatpush1.msra.mxu0 %v809
    %1026 = vmatprep.subr.mxu0 %v814
    %1027 = vmatpush1.msra.mxu0 %v813
    %1028 = vmatprep.subr.mxu0 %v818
    %1029 = vmatpush1.msra.mxu0 %v817
    %1030 = vmatprep.subr.mxu0 %v822
    %1031 = vmatpush1.msra.mxu0 %v821
    %1032 = vmatprep.subr.mxu0 %v826
    %1033 = vmatpush1.msra.mxu0 %v825
    %1034 = vmatprep.subr.mxu0 %v830
    %1035 = vmatpush1.msra.mxu0 %v829
    %1036 = vmatprep.subr.mxu0 %v834
    %1037 = vmatpush1.msra.mxu0 %v833
    %1038 = vmatprep.subr.mxu0 %v838
    %1039 = vmatpush1.msra.mxu0 %v837
    %1040 = vmatprep.subr.mxu0 %v842
    %1041 = vmatpush1.msra.mxu0 %v841
    %1042 = vmatprep.subr.mxu0 %v846
    %1043 = vmatpush1.msra.mxu0 %v845
    %1044 = vmatprep.subr.mxu0 %v850
    %1045 = vmatpush1.msra.mxu0 %v849
    %1046 = vmatprep.subr.mxu0 %v854
    %1047 = vmatpush1.msra.mxu0 %v853
    %1048 = vmatprep.subr.mxu0 %v858
    %1049 = vmatpush1.msra.mxu0 %v857
    %1050 = vmatprep.mubr.f32.mxu0 %v592
    %1051 = vmatmul.mubr.f32.gmra.mrb[0].mxu0 %v591
    %v1052 = vpop.f32.mrb[0].mxu0
    %v1053 = vadd.f32 %v964, %v1052
    %v1054 = vpop.f32.mrb[0].mxu0
    %v1055 = vadd.f32 %v966, %v1054
    %1056 = vmatprep.mubr.f32.mxu0 %v596
    %1057 = vmatmul.mubr.f32.gmra.mrb[0].mxu0 %v595
    %v1058 = vpop.f32.mrb[0].mxu0
    %v1059 = vadd.f32 %v970, %v1058
    %v1060 = vpop.f32.mrb[0].mxu0
    %v1061 = vadd.f32 %v972, %v1060
    %1062 = vmatprep.mubr.f32.mxu0 %v600
    %1063 = vmatmul.mubr.f32.gmra.mrb[0].mxu0 %v599
    %v1064 = vpop.f32.mrb[0].mxu0
    %v1065 = vadd.f32 %v976, %v1064
    %v1066 = vpop.f32.mrb[0].mxu0
    %v1067 = vadd.f32 %v978, %v1066
    %1068 = vmatprep.mubr.f32.mxu0 %v604
    %1069 = vmatmul.mubr.f32.gmra.mrb[0].mxu0 %v603
    %v1070 = vpop.f32.mrb[0].mxu0
    %v1071 = vadd.f32 %v982, %v1070
    %v1072 = vpop.f32.mrb[0].mxu0
    %v1073 = vadd.f32 %v984, %v1072
    %1074 = vdwg.mxu0
    %1075 = vmatprep.subr.mxu0 %v608
    %1076 = vmatpush1.msra.mxu0 %v607
    %1077 = vmatprep.subr.mxu0 %v612
    %1078 = vmatpush1.msra.mxu0 %v611
    %1079 = vmatprep.subr.mxu0 %v616
    %1080 = vmatpush1.msra.mxu0 %v615
    %1081 = vmatprep.subr.mxu0 %v620
    %1082 = vmatpush1.msra.mxu0 %v619
    %1083 = vmatprep.subr.mxu0 %v624
    %1084 = vmatpush1.msra.mxu0 %v623
    %1085 = vmatprep.subr.mxu0 %v628
    %1086 = vmatpush1.msra.mxu0 %v627
    %1087 = vmatprep.subr.mxu0 %v632
    %1088 = vmatpush1.msra.mxu0 %v631
    %1089 = vmatprep.subr.mxu0 %v636
    %1090 = vmatpush1.msra.mxu0 %v635
    %1091 = vmatprep.subr.mxu0 %v640
    %1092 = vmatpush1.msra.mxu0 %v639
    %1093 = vmatprep.subr.mxu0 %v644
    %1094 = vmatpush1.msra.mxu0 %v643
    %1095 = vmatprep.subr.mxu0 %v648
    %1096 = vmatpush1.msra.mxu0 %v647
    %1097 = vmatprep.subr.mxu0 %v652
    %1098 = vmatpush1.msra.mxu0 %v651
    %1099 = vmatprep.subr.mxu0 %v656
    %1100 = vmatpush1.msra.mxu0 %v655
    %1101 = vmatprep.subr.mxu0 %v660
    %1102 = vmatpush1.msra.mxu0 %v659
    %1103 = vmatprep.subr.mxu0 %v664
    %1104 = vmatpush1.msra.mxu0 %v663
    %1105 = vmatprep.subr.mxu0 %v668
    %1106 = vmatpush1.msra.mxu0 %v667
    %1107 = vmatprep.subr.mxu0 %v672
    %1108 = vmatpush1.msra.mxu0 %v671
    %1109 = vmatprep.subr.mxu0 %v676
    %1110 = vmatpush1.msra.mxu0 %v675
    %1111 = vmatprep.subr.mxu0 %v680
    %1112 = vmatpush1.msra.mxu0 %v679
    %1113 = vmatprep.subr.mxu0 %v684
    %1114 = vmatpush1.msra.mxu0 %v683
    %1115 = vmatprep.subr.mxu0 %v688
    %1116 = vmatpush1.msra.mxu0 %v687
    %1117 = vmatprep.subr.mxu0 %v692
    %1118 = vmatpush1.msra.mxu0 %v691
    %1119 = vmatprep.subr.mxu0 %v696
    %1120 = vmatpush1.msra.mxu0 %v695
    %1121 = vmatprep.subr.mxu0 %v700
    %1122 = vmatpush1.msra.mxu0 %v699
    %1123 = vmatprep.subr.mxu0 %v704
    %1124 = vmatpush1.msra.mxu0 %v703
    %1125 = vmatprep.subr.mxu0 %v708
    %1126 = vmatpush1.msra.mxu0 %v707
    %1127 = vmatprep.subr.mxu0 %v712
    %1128 = vmatpush1.msra.mxu0 %v711
    %1129 = vmatprep.subr.mxu0 %v716
    %1130 = vmatpush1.msra.mxu0 %v715
    %1131 = vmatprep.subr.mxu0 %v720
    %1132 = vmatpush1.msra.mxu0 %v719
    %1133 = vmatprep.subr.mxu0 %v724
    %1134 = vmatpush1.msra.mxu0 %v723
    %1135 = vmatprep.subr.mxu0 %v728
    %1136 = vmatpush1.msra.mxu0 %v727
    %1137 = vmatprep.subr.mxu0 %v732
    %1138 = vmatpush1.msra.mxu0 %v731
    %1139 = vmatprep.mubr.f32.mxu0 %v590
    %1140 = vmatmul.mubr.f32.gmra.mrb[0].mxu0 %v589
    %v1141 = vpop.f32.mrb[0].mxu0
    %v1142 = vadd.f32 %v892, %v1141
    %v1143 = vpop.f32.mrb[0].mxu0
    %v1144 = vadd.f32 %v896, %v1143
    %1145 = vmatprep.mubr.f32.mxu0 %v594
    %1146 = vmatmul.mubr.f32.gmra.mrb[0].mxu0 %v593
    %v1147 = vpop.f32.mrb[0].mxu0
    %v1148 = vadd.f32 %v892, %v1147
    %v1149 = vpop.f32.mrb[0].mxu0
    %v1150 = vadd.f32 %v896, %v1149
    %1151 = vmatprep.mubr.f32.mxu0 %v598
    %1152 = vmatmul.mubr.f32.gmra.mrb[0].mxu0 %v597
    %v1153 = vpop.f32.mrb[0].mxu0
    %v1154 = vadd.f32 %v892, %v1153
    %v1155 = vpop.f32.mrb[0].mxu0
    %v1156 = vadd.f32 %v896, %v1155
    %1157 = vmatprep.mubr.f32.mxu0 %v602
    %1158 = vmatmul.mubr.f32.gmra.mrb[0].mxu0 %v601
    %v1159 = vpop.f32.mrb[0].mxu0
    %v1160 = vadd.f32 %v892, %v1159
    %v1161 = vpop.f32.mrb[0].mxu0
    %v1162 = vadd.f32 %v896, %v1161
    %1163 = vdwg.mxu0
    %1164 = vmatprep.subr.mxu0 %v736
    %1165 = vmatpush1.msra.mxu0 %v735
    %1166 = vmatprep.subr.mxu0 %v740
    %1167 = vmatpush1.msra.mxu0 %v739
    %1168 = vmatprep.subr.mxu0 %v744
    %1169 = vmatpush1.msra.mxu0 %v743
    %1170 = vmatprep.subr.mxu0 %v748
    %1171 = vmatpush1.msra.mxu0 %v747
    %1172 = vmatprep.subr.mxu0 %v752
    %1173 = vmatpush1.msra.mxu0 %v751
    %1174 = vmatprep.subr.mxu0 %v756
    %1175 = vmatpush1.msra.mxu0 %v755
    %1176 = vmatprep.subr.mxu0 %v760
    %1177 = vmatpush1.msra.mxu0 %v759
    %1178 = vmatprep.subr.mxu0 %v764
    %1179 = vmatpush1.msra.mxu0 %v763
    %1180 = vmatprep.subr.mxu0 %v768
    %1181 = vmatpush1.msra.mxu0 %v767
    %1182 = vmatprep.subr.mxu0 %v772
    %1183 = vmatpush1.msra.mxu0 %v771
    %1184 = vmatprep.subr.mxu0 %v776
    %1185 = vmatpush1.msra.mxu0 %v775
    %1186 = vmatprep.subr.mxu0 %v780
    %1187 = vmatpush1.msra.mxu0 %v779
    %1188 = vmatprep.subr.mxu0 %v784
    %1189 = vmatpush1.msra.mxu0 %v783
    %1190 = vmatprep.subr.mxu0 %v788
    %1191 = vmatpush1.msra.mxu0 %v787
    %1192 = vmatprep.subr.mxu0 %v792
    %1193 = vmatpush1.msra.mxu0 %v791
    %1194 = vmatprep.subr.mxu0 %v796
    %1195 = vmatpush1.msra.mxu0 %v795
    %1196 = vmatprep.subr.mxu0 %v800
    %1197 = vmatpush1.msra.mxu0 %v799
    %1198 = vmatprep.subr.mxu0 %v804
    %1199 = vmatpush1.msra.mxu0 %v803
    %1200 = vmatprep.subr.mxu0 %v808
    %1201 = vmatpush1.msra.mxu0 %v807
    %1202 = vmatprep.subr.mxu0 %v812
    %1203 = vmatpush1.msra.mxu0 %v811
    %1204 = vmatprep.subr.mxu0 %v816
    %1205 = vmatpush1.msra.mxu0 %v815
    %1206 = vmatprep.subr.mxu0 %v820
    %1207 = vmatpush1.msra.mxu0 %v819
    %1208 = vmatprep.subr.mxu0 %v824
    %1209 = vmatpush1.msra.mxu0 %v823
    %1210 = vmatprep.subr.mxu0 %v828
    %1211 = vmatpush1.msra.mxu0 %v827
    %1212 = vmatprep.subr.mxu0 %v832
    %1213 = vmatpush1.msra.mxu0 %v831
    %1214 = vmatprep.subr.mxu0 %v836
    %1215 = vmatpush1.msra.mxu0 %v835
    %1216 = vmatprep.subr.mxu0 %v840
    %1217 = vmatpush1.msra.mxu0 %v839
    %1218 = vmatprep.subr.mxu0 %v844
    %1219 = vmatpush1.msra.mxu0 %v843
    %1220 = vmatprep.subr.mxu0 %v848
    %1221 = vmatpush1.msra.mxu0 %v847
    %1222 = vmatprep.subr.mxu0 %v852
    %1223 = vmatpush1.msra.mxu0 %v851
    %1224 = vmatprep.subr.mxu0 %v856
    %1225 = vmatpush1.msra.mxu0 %v855
    %1226 = vmatprep.subr.mxu0 %v860
    %1227 = vmatpush1.msra.mxu0 %v859
    %1228 = vmatprep.mubr.f32.mxu0 %v592
    %1229 = vmatmul.mubr.f32.gmra.mrb[0].mxu0 %v591
    %v1230 = vpop.f32.mrb[0].mxu0
    %v1231 = vadd.f32 %v1142, %v1230
    %v1232 = vpop.f32.mrb[0].mxu0
    %v1233 = vadd.f32 %v1144, %v1232
    %1234 = vmatprep.mubr.f32.mxu0 %v596
    %1235 = vmatmul.mubr.f32.gmra.mrb[0].mxu0 %v595
    %v1236 = vpop.f32.mrb[0].mxu0
    %v1237 = vadd.f32 %v1148, %v1236
    %v1238 = vpop.f32.mrb[0].mxu0
    %v1239 = vadd.f32 %v1150, %v1238
    %1240 = vmatprep.mubr.f32.mxu0 %v600
    %1241 = vmatmul.mubr.f32.gmra.mrb[0].mxu0 %v599
    %v1242 = vpop.f32.mrb[0].mxu0
    %v1243 = vadd.f32 %v1154, %v1242
    %v1244 = vpop.f32.mrb[0].mxu0
    %v1245 = vadd.f32 %v1156, %v1244
    %1246 = vmatprep.mubr.f32.mxu0 %v604
    %1247 = vmatmul.mubr.f32.gmra.mrb[0].mxu0 %v603
    %v1248 = vpop.f32.mrb[0].mxu0
    %v1249 = vadd.f32 %v1160, %v1248
    %v1250 = vpop.f32.mrb[0].mxu0
    %v1251 = vadd.f32 %v1162, %v1250
    %1252 = vdwg.mxu0
    %v1253 = vmul.f32 %v1231, %v210
    %v1254 = vmul.f32 %v1233, %v211
    %v1255 = vmul.f32 %v1237, %v212
    %v1256 = vmul.f32 %v1239, %v213
    %v1257 = vmul.f32 %v1231, %v214
    %v1258 = vmul.f32 %v1233, %v215
    %v1259 = vmul.f32 %v1237, %v216
    %v1260 = vmul.f32 %v1239, %v217
    %v1261 = vmul.f32 %v1231, %v218
    %v1262 = vmul.f32 %v1233, %v219
    %v1263 = vmul.f32 %v1237, %v220
    %v1264 = vmul.f32 %v1239, %v221
    %v1265 = vmul.f32 %v1231, %v222
    %v1266 = vmul.f32 %v1233, %v223
    %v1267 = vmul.f32 %v1237, %v224
    %v1268 = vmul.f32 %v1239, %v225
    %v1269 = vmul.f32 %v1231, %v226
    %v1270 = vmul.f32 %v1233, %v227
    %v1271 = vmul.f32 %v1237, %v228
    %v1272 = vmul.f32 %v1239, %v229
    %v1273 = vmul.f32 %v1231, %v230
    %v1274 = vmul.f32 %v1233, %v231
    %v1275 = vmul.f32 %v1237, %v232
    %v1276 = vmul.f32 %v1239, %v233
    %v1277 = vmul.f32 %v1231, %v234
    %v1278 = vmul.f32 %v1233, %v235
    %v1279 = vmul.f32 %v1237, %v236
    %v1280 = vmul.f32 %v1239, %v237
    %v1281 = vmul.f32 %v1231, %v238
    %v1282 = vmul.f32 %v1233, %v239
    %v1283 = vmul.f32 %v1237, %v240
    %v1284 = vmul.f32 %v1239, %v241
    %v1285 = vmul.f32 %v1231, %v242
    %v1286 = vmul.f32 %v1233, %v243
    %v1287 = vmul.f32 %v1237, %v244
    %v1288 = vmul.f32 %v1239, %v245
    %v1289 = vmul.f32 %v1231, %v246
    %v1290 = vmul.f32 %v1233, %v247
    %v1291 = vmul.f32 %v1237, %v248
    %v1292 = vmul.f32 %v1239, %v249
    %v1293 = vmul.f32 %v1231, %v250
    %v1294 = vmul.f32 %v1233, %v251
    %v1295 = vmul.f32 %v1237, %v252
    %v1296 = vmul.f32 %v1239, %v253
    %v1297 = vmul.f32 %v1231, %v254
    %v1298 = vmul.f32 %v1233, %v255
    %v1299 = vmul.f32 %v1237, %v256
    %v1300 = vmul.f32 %v1239, %v257
    %v1301 = vmul.f32 %v1231, %v258
    %v1302 = vmul.f32 %v1233, %v259
    %v1303 = vmul.f32 %v1237, %v260
    %v1304 = vmul.f32 %v1239, %v261
    %v1305 = vmul.f32 %v1231, %v262
    %v1306 = vmul.f32 %v1233, %v263
    %v1307 = vmul.f32 %v1237, %v264
    %v1308 = vmul.f32 %v1239, %v265
    %v1309 = vmul.f32 %v1231, %v266
    %v1310 = vmul.f32 %v1233, %v267
    %v1311 = vmul.f32 %v1237, %v268
    %v1312 = vmul.f32 %v1239, %v269
    %v1313 = vmul.f32 %v1231, %v270
    %v1314 = vmul.f32 %v1233, %v271
    %v1315 = vmul.f32 %v1237, %v272
    %v1316 = vmul.f32 %v1239, %v273
    %v1317 = vmul.f32 %v1243, %v210
    %v1318 = vmul.f32 %v1245, %v211
    %v1319 = vmul.f32 %v1249, %v212
    %v1320 = vmul.f32 %v1251, %v213
    %v1321 = vmul.f32 %v1243, %v214
    %v1322 = vmul.f32 %v1245, %v215
    %v1323 = vmul.f32 %v1249, %v216
    %v1324 = vmul.f32 %v1251, %v217
    %v1325 = vmul.f32 %v1243, %v218
    %v1326 = vmul.f32 %v1245, %v219
    %v1327 = vmul.f32 %v1249, %v220
    %v1328 = vmul.f32 %v1251, %v221
    %v1329 = vmul.f32 %v1243, %v222
    %v1330 = vmul.f32 %v1245, %v223
    %v1331 = vmul.f32 %v1249, %v224
    %v1332 = vmul.f32 %v1251, %v225
    %v1333 = vmul.f32 %v1243, %v226
    %v1334 = vmul.f32 %v1245, %v227
    %v1335 = vmul.f32 %v1249, %v228
    %v1336 = vmul.f32 %v1251, %v229
    %v1337 = vmul.f32 %v1243, %v230
    %v1338 = vmul.f32 %v1245, %v231
    %v1339 = vmul.f32 %v1249, %v232
    %v1340 = vmul.f32 %v1251, %v233
    %v1341 = vmul.f32 %v1243, %v234
    %v1342 = vmul.f32 %v1245, %v235
    %v1343 = vmul.f32 %v1249, %v236
    %v1344 = vmul.f32 %v1251, %v237
    %v1345 = vmul.f32 %v1243, %v238
    %v1346 = vmul.f32 %v1245, %v239
    %v1347 = vmul.f32 %v1249, %v240
    %v1348 = vmul.f32 %v1251, %v241
    %v1349 = vmul.f32 %v1243, %v242
    %v1350 = vmul.f32 %v1245, %v243
    %v1351 = vmul.f32 %v1249, %v244
    %v1352 = vmul.f32 %v1251, %v245
    %v1353 = vmul.f32 %v1243, %v246
    %v1354 = vmul.f32 %v1245, %v247
    %v1355 = vmul.f32 %v1249, %v248
    %v1356 = vmul.f32 %v1251, %v249
    %v1357 = vmul.f32 %v1243, %v250
    %v1358 = vmul.f32 %v1245, %v251
    %v1359 = vmul.f32 %v1249, %v252
    %v1360 = vmul.f32 %v1251, %v253
    %v1361 = vmul.f32 %v1243, %v254
    %v1362 = vmul.f32 %v1245, %v255
    %v1363 = vmul.f32 %v1249, %v256
    %v1364 = vmul.f32 %v1251, %v257
    %v1365 = vmul.f32 %v1243, %v258
    %v1366 = vmul.f32 %v1245, %v259
    %v1367 = vmul.f32 %v1249, %v260
    %v1368 = vmul.f32 %v1251, %v261
    %v1369 = vmul.f32 %v1243, %v262
    %v1370 = vmul.f32 %v1245, %v263
    %v1371 = vmul.f32 %v1249, %v264
    %v1372 = vmul.f32 %v1251, %v265
    %v1373 = vmul.f32 %v1243, %v266
    %v1374 = vmul.f32 %v1245, %v267
    %v1375 = vmul.f32 %v1249, %v268
    %v1376 = vmul.f32 %v1251, %v269
    %v1377 = vmul.f32 %v1243, %v270
    %v1378 = vmul.f32 %v1245, %v271
    %v1379 = vmul.f32 %v1249, %v272
    %v1380 = vmul.f32 %v1251, %v273
    %1381 = vmatprep.subr.mxu0 %v1254
    %1382 = vmatpush1.msra.mxu0 %v1253
    %1383 = vmatprep.subr.mxu0 %v1256
    %1384 = vmatpush1.msra.mxu0 %v1255
    %1385 = vmatprep.subr.mxu0 %v1258
    %1386 = vmatpush1.msra.mxu0 %v1257
    %1387 = vmatprep.subr.mxu0 %v1260
    %1388 = vmatpush1.msra.mxu0 %v1259
    %1389 = vmatprep.subr.mxu0 %v1262
    %1390 = vmatpush1.msra.mxu0 %v1261
    %1391 = vmatprep.subr.mxu0 %v1264
    %1392 = vmatpush1.msra.mxu0 %v1263
    %1393 = vmatprep.subr.mxu0 %v1266
    %1394 = vmatpush1.msra.mxu0 %v1265
    %1395 = vmatprep.subr.mxu0 %v1268
    %1396 = vmatpush1.msra.mxu0 %v1267
    %1397 = vmatprep.subr.mxu0 %v1270
    %1398 = vmatpush1.msra.mxu0 %v1269
    %1399 = vmatprep.subr.mxu0 %v1272
    %1400 = vmatpush1.msra.mxu0 %v1271
    %1401 = vmatprep.subr.mxu0 %v1274
    %1402 = vmatpush1.msra.mxu0 %v1273
    %1403 = vmatprep.subr.mxu0 %v1276
    %1404 = vmatpush1.msra.mxu0 %v1275
    %1405 = vmatprep.subr.mxu0 %v1278
    %1406 = vmatpush1.msra.mxu0 %v1277
    %1407 = vmatprep.subr.mxu0 %v1280
    %1408 = vmatpush1.msra.mxu0 %v1279
    %1409 = vmatprep.subr.mxu0 %v1282
    %1410 = vmatpush1.msra.mxu0 %v1281
    %1411 = vmatprep.subr.mxu0 %v1284
    %1412 = vmatpush1.msra.mxu0 %v1283
    %1413 = vmatprep.subr.mxu0 %v1286
    %1414 = vmatpush1.msra.mxu0 %v1285
    %1415 = vmatprep.subr.mxu0 %v1288
    %1416 = vmatpush1.msra.mxu0 %v1287
    %1417 = vmatprep.subr.mxu0 %v1290
    %1418 = vmatpush1.msra.mxu0 %v1289
    %1419 = vmatprep.subr.mxu0 %v1292
    %1420 = vmatpush1.msra.mxu0 %v1291
    %1421 = vmatprep.subr.mxu0 %v1294
    %1422 = vmatpush1.msra.mxu0 %v1293
    %1423 = vmatprep.subr.mxu0 %v1296
    %1424 = vmatpush1.msra.mxu0 %v1295
    %1425 = vmatprep.subr.mxu0 %v1298
    %1426 = vmatpush1.msra.mxu0 %v1297
    %1427 = vmatprep.subr.mxu0 %v1300
    %1428 = vmatpush1.msra.mxu0 %v1299
    %1429 = vmatprep.subr.mxu0 %v1302
    %1430 = vmatpush1.msra.mxu0 %v1301
    %1431 = vmatprep.subr.mxu0 %v1304
    %1432 = vmatpush1.msra.mxu0 %v1303
    %1433 = vmatprep.subr.mxu0 %v1306
    %1434 = vmatpush1.msra.mxu0 %v1305
    %1435 = vmatprep.subr.mxu0 %v1308
    %1436 = vmatpush1.msra.mxu0 %v1307
    %1437 = vmatprep.subr.mxu0 %v1310
    %1438 = vmatpush1.msra.mxu0 %v1309
    %1439 = vmatprep.subr.mxu0 %v1312
    %1440 = vmatpush1.msra.mxu0 %v1311
    %1441 = vmatprep.subr.mxu0 %v1314
    %1442 = vmatpush1.msra.mxu0 %v1313
    %1443 = vmatprep.subr.mxu0 %v1316
    %1444 = vmatpush1.msra.mxu0 %v1315
    %1445 = vmatprep.mubr.f32.mxu0 %v1055
    %1446 = vmatmul.mubr.f32.gmra.mrb[0].mxu0 %v1053
    %v1447 = vpop.f32.mrb[0].mxu0
    %v1448 = vadd.f32 0.0, %v1447
    %v1449 = vpop.f32.mrb[0].mxu0
    %v1450 = vadd.f32 0.0, %v1449
    %1451 = vmatprep.mubr.f32.mxu0 %v1061
    %1452 = vmatmul.mubr.f32.gmra.mrb[0].mxu0 %v1059
    %v1453 = vpop.f32.mrb[0].mxu0
    %v1454 = vadd.f32 0.0, %v1453
    %v1455 = vpop.f32.mrb[0].mxu0
    %v1456 = vadd.f32 0.0, %v1455
    %1457 = vdwg.mxu0
    %1458 = vmatprep.subr.mxu0 %v1318
    %1459 = vmatpush1.msra.mxu0 %v1317
    %1460 = vmatprep.subr.mxu0 %v1320
    %1461 = vmatpush1.msra.mxu0 %v1319
    %1462 = vmatprep.subr.mxu0 %v1322
    %1463 = vmatpush1.msra.mxu0 %v1321
    %1464 = vmatprep.subr.mxu0 %v1324
    %1465 = vmatpush1.msra.mxu0 %v1323
    %1466 = vmatprep.subr.mxu0 %v1326
    %1467 = vmatpush1.msra.mxu0 %v1325
    %1468 = vmatprep.subr.mxu0 %v1328
    %1469 = vmatpush1.msra.mxu0 %v1327
    %1470 = vmatprep.subr.mxu0 %v1330
    %1471 = vmatpush1.msra.mxu0 %v1329
    %1472 = vmatprep.subr.mxu0 %v1332
    %1473 = vmatpush1.msra.mxu0 %v1331
    %1474 = vmatprep.subr.mxu0 %v1334
    %1475 = vmatpush1.msra.mxu0 %v1333
    %1476 = vmatprep.subr.mxu0 %v1336
    %1477 = vmatpush1.msra.mxu0 %v1335
    %1478 = vmatprep.subr.mxu0 %v1338
    %1479 = vmatpush1.msra.mxu0 %v1337
    %1480 = vmatprep.subr.mxu0 %v1340
    %1481 = vmatpush1.msra.mxu0 %v1339
    %1482 = vmatprep.subr.mxu0 %v1342
    %1483 = vmatpush1.msra.mxu0 %v1341
    %1484 = vmatprep.subr.mxu0 %v1344
    %1485 = vmatpush1.msra.mxu0 %v1343
    %1486 = vmatprep.subr.mxu0 %v1346
    %1487 = vmatpush1.msra.mxu0 %v1345
    %1488 = vmatprep.subr.mxu0 %v1348
    %1489 = vmatpush1.msra.mxu0 %v1347
    %1490 = vmatprep.subr.mxu0 %v1350
    %1491 = vmatpush1.msra.mxu0 %v1349
    %1492 = vmatprep.subr.mxu0 %v1352
    %1493 = vmatpush1.msra.mxu0 %v1351
    %1494 = vmatprep.subr.mxu0 %v1354
    %1495 = vmatpush1.msra.mxu0 %v1353
    %1496 = vmatprep.subr.mxu0 %v1356
    %1497 = vmatpush1.msra.mxu0 %v1355
    %1498 = vmatprep.subr.mxu0 %v1358
    %1499 = vmatpush1.msra.mxu0 %v1357
    %1500 = vmatprep.subr.mxu0 %v1360
    %1501 = vmatpush1.msra.mxu0 %v1359
    %1502 = vmatprep.subr.mxu0 %v1362
    %1503 = vmatpush1.msra.mxu0 %v1361
    %1504 = vmatprep.subr.mxu0 %v1364
    %1505 = vmatpush1.msra.mxu0 %v1363
    %1506 = vmatprep.subr.mxu0 %v1366
    %1507 = vmatpush1.msra.mxu0 %v1365
    %1508 = vmatprep.subr.mxu0 %v1368
    %1509 = vmatpush1.msra.mxu0 %v1367
    %1510 = vmatprep.subr.mxu0 %v1370
    %1511 = vmatpush1.msra.mxu0 %v1369
    %1512 = vmatprep.subr.mxu0 %v1372
    %1513 = vmatpush1.msra.mxu0 %v1371
    %1514 = vmatprep.subr.mxu0 %v1374
    %1515 = vmatpush1.msra.mxu0 %v1373
    %1516 = vmatprep.subr.mxu0 %v1376
    %1517 = vmatpush1.msra.mxu0 %v1375
    %1518 = vmatprep.subr.mxu0 %v1378
    %1519 = vmatpush1.msra.mxu0 %v1377
    %1520 = vmatprep.subr.mxu0 %v1380
    %1521 = vmatpush1.msra.mxu0 %v1379
    %1522 = vmatprep.mubr.f32.mxu0 %v1067
    %1523 = vmatmul.mubr.f32.gmra.mrb[0].mxu0 %v1065
    %v1524 = vpop.f32.mrb[0].mxu0
    %v1525 = vadd.f32 0.0, %v1524
    %v1526 = vpop.f32.mrb[0].mxu0
    %v1527 = vadd.f32 0.0, %v1526
    %1528 = vmatprep.mubr.f32.mxu0 %v1073
    %1529 = vmatmul.mubr.f32.gmra.mrb[0].mxu0 %v1071
    %v1530 = vpop.f32.mrb[0].mxu0
    %v1531 = vadd.f32 0.0, %v1530
    %v1532 = vpop.f32.mrb[0].mxu0
    %v1533 = vadd.f32 0.0, %v1532
    %1534 = vdwg.mxu0
    %1535 = vmatprep.subr.mxu0 %v178
    %1536 = vmatpush1.msra.mxu0 %v177
    %1537 = vmatprep.subr.mxu0 %v180
    %1538 = vmatpush1.msra.mxu0 %v179
    %1539 = vmatprep.subr.mxu0 %v182
    %1540 = vmatpush1.msra.mxu0 %v181
    %1541 = vmatprep.subr.mxu0 %v184
    %1542 = vmatpush1.msra.mxu0 %v183
    %1543 = vmatprep.subr.mxu0 %v186
    %1544 = vmatpush1.msra.mxu0 %v185
    %1545 = vmatprep.subr.mxu0 %v188
    %1546 = vmatpush1.msra.mxu0 %v187
    %1547 = vmatprep.subr.mxu0 %v190
    %1548 = vmatpush1.msra.mxu0 %v189
    %1549 = vmatprep.subr.mxu0 %v192
    %1550 = vmatpush1.msra.mxu0 %v191
    %1551 = vmatprep.subr.mxu0 %v194
    %1552 = vmatpush1.msra.mxu0 %v193
    %1553 = vmatprep.subr.mxu0 %v196
    %1554 = vmatpush1.msra.mxu0 %v195
    %1555 = vmatprep.subr.mxu0 %v198
    %1556 = vmatpush1.msra.mxu0 %v197
    %1557 = vmatprep.subr.mxu0 %v200
    %1558 = vmatpush1.msra.mxu0 %v199
    %1559 = vmatprep.subr.mxu0 %v202
    %1560 = vmatpush1.msra.mxu0 %v201
    %1561 = vmatprep.subr.mxu0 %v204
    %1562 = vmatpush1.msra.mxu0 %v203
    %1563 = vmatprep.subr.mxu0 %v206
    %1564 = vmatpush1.msra.mxu0 %v205
    %1565 = vmatprep.subr.mxu0 %v208
    %1566 = vmatpush1.msra.mxu0 %v207
    %1567 = vmatprep.subr.mxu0 0.0
    %1568 = vmatpush1.msra.mxu0 0.0
    %1569 = vmatprep.subr.mxu0 0.0
    %1570 = vmatpush1.msra.mxu0 0.0
    %1571 = vmatprep.subr.mxu0 0.0
    %1572 = vmatpush1.msra.mxu0 0.0
    %1573 = vmatprep.subr.mxu0 0.0
    %1574 = vmatpush1.msra.mxu0 0.0
    %1575 = vmatprep.subr.mxu0 0.0
    %1576 = vmatpush1.msra.mxu0 0.0
    %1577 = vmatprep.subr.mxu0 0.0
    %1578 = vmatpush1.msra.mxu0 0.0
    %1579 = vmatprep.subr.mxu0 0.0
    %1580 = vmatpush1.msra.mxu0 0.0
    %1581 = vmatprep.subr.mxu0 0.0
    %1582 = vmatpush1.msra.mxu0 0.0
    %1583 = vmatprep.subr.mxu0 0.0
    %1584 = vmatpush1.msra.mxu0 0.0
    %1585 = vmatprep.subr.mxu0 0.0
    %1586 = vmatpush1.msra.mxu0 0.0
    %1587 = vmatprep.subr.mxu0 0.0
    %1588 = vmatpush1.msra.mxu0 0.0
    %1589 = vmatprep.subr.mxu0 0.0
    %1590 = vmatpush1.msra.mxu0 0.0
    %1591 = vmatprep.subr.mxu0 0.0
    %1592 = vmatpush1.msra.mxu0 0.0
    %1593 = vmatprep.subr.mxu0 0.0
    %1594 = vmatpush1.msra.mxu0 0.0
    %1595 = vmatprep.subr.mxu0 0.0
    %1596 = vmatpush1.msra.mxu0 0.0
    %1597 = vmatprep.subr.mxu0 0.0
    %1598 = vmatpush1.msra.mxu0 0.0
    %1599 = vmatprep.mubr.f32.mxu0 0.0
    %1600 = vmatmul.mubr.f32.gmra.mrb[0].mxu0 %v274
    %v1601 = vpop.f32.mrb[0].mxu0
    %v1602 = vadd.f32 0.0, %v1601
    %v1603 = vpop.f32.mrb[0].mxu0
    %v1604 = vadd.f32 0.0, %v1603
    %1605 = vmatprep.mubr.f32.mxu0 0.0
    %1606 = vmatmul.mubr.f32.gmra.mrb[0].mxu0 %v275
    %v1607 = vpop.f32.mrb[0].mxu0
    %v1608 = vadd.f32 0.0, %v1607
    %v1609 = vpop.f32.mrb[0].mxu0
    %v1610 = vadd.f32 0.0, %v1609
    %1611 = vmatprep.mubr.f32.mxu0 0.0
    %1612 = vmatmul.mubr.f32.gmra.mrb[0].mxu0 %v276
    %v1613 = vpop.f32.mrb[0].mxu0
    %v1614 = vadd.f32 0.0, %v1613
    %v1615 = vpop.f32.mrb[0].mxu0
    %v1616 = vadd.f32 0.0, %v1615
    %1617 = vmatprep.mubr.f32.mxu0 0.0
    %1618 = vmatmul.mubr.f32.gmra.mrb[0].mxu0 %v277
    %v1619 = vpop.f32.mrb[0].mxu0
    %v1620 = vadd.f32 0.0, %v1619
    %v1621 = vpop.f32.mrb[0].mxu0
    %v1622 = vadd.f32 0.0, %v1621
    %1623 = vdwg.mxu0
    %1624 = vmatprep.subr.mxu0 %v114
    %1625 = vmatpush1.msra.mxu0 %v113
    %1626 = vmatprep.subr.mxu0 %v116
    %1627 = vmatpush1.msra.mxu0 %v115
    %1628 = vmatprep.subr.mxu0 %v118
    %1629 = vmatpush1.msra.mxu0 %v117
    %1630 = vmatprep.subr.mxu0 %v120
    %1631 = vmatpush1.msra.mxu0 %v119
    %1632 = vmatprep.subr.mxu0 %v122
    %1633 = vmatpush1.msra.mxu0 %v121
    %1634 = vmatprep.subr.mxu0 %v124
    %1635 = vmatpush1.msra.mxu0 %v123
    %1636 = vmatprep.subr.mxu0 %v126
    %1637 = vmatpush1.msra.mxu0 %v125
    %1638 = vmatprep.subr.mxu0 %v128
    %1639 = vmatpush1.msra.mxu0 %v127
    %1640 = vmatprep.subr.mxu0 %v130
    %1641 = vmatpush1.msra.mxu0 %v129
    %1642 = vmatprep.subr.mxu0 %v132
    %1643 = vmatpush1.msra.mxu0 %v131
    %1644 = vmatprep.subr.mxu0 %v134
    %1645 = vmatpush1.msra.mxu0 %v133
    %1646 = vmatprep.subr.mxu0 %v136
    %1647 = vmatpush1.msra.mxu0 %v135
    %1648 = vmatprep.subr.mxu0 %v138
    %1649 = vmatpush1.msra.mxu0 %v137
    %1650 = vmatprep.subr.mxu0 %v140
    %1651 = vmatpush1.msra.mxu0 %v139
    %1652 = vmatprep.subr.mxu0 %v142
    %1653 = vmatpush1.msra.mxu0 %v141
    %1654 = vmatprep.subr.mxu0 %v144
    %1655 = vmatpush1.msra.mxu0 %v143
    %1656 = vmatprep.subr.mxu0 %v146
    %1657 = vmatpush1.msra.mxu0 %v145
    %1658 = vmatprep.subr.mxu0 %v148
    %1659 = vmatpush1.msra.mxu0 %v147
    %1660 = vmatprep.subr.mxu0 %v150
    %1661 = vmatpush1.msra.mxu0 %v149
    %1662 = vmatprep.subr.mxu0 %v152
    %1663 = vmatpush1.msra.mxu0 %v151
    %1664 = vmatprep.subr.mxu0 %v154
    %1665 = vmatpush1.msra.mxu0 %v153
    %1666 = vmatprep.subr.mxu0 %v156
    %1667 = vmatpush1.msra.mxu0 %v155
    %1668 = vmatprep.subr.mxu0 %v158
    %1669 = vmatpush1.msra.mxu0 %v157
    %1670 = vmatprep.subr.mxu0 %v160
    %1671 = vmatpush1.msra.mxu0 %v159
    %1672 = vmatprep.subr.mxu0 %v162
    %1673 = vmatpush1.msra.mxu0 %v161
    %1674 = vmatprep.subr.mxu0 %v164
    %1675 = vmatpush1.msra.mxu0 %v163
    %1676 = vmatprep.subr.mxu0 %v166
    %1677 = vmatpush1.msra.mxu0 %v165
    %1678 = vmatprep.subr.mxu0 %v168
    %1679 = vmatpush1.msra.mxu0 %v167
    %1680 = vmatprep.subr.mxu0 %v170
    %1681 = vmatpush1.msra.mxu0 %v169
    %1682 = vmatprep.subr.mxu0 %v172
    %1683 = vmatpush1.msra.mxu0 %v171
    %1684 = vmatprep.subr.mxu0 %v174
    %1685 = vmatpush1.msra.mxu0 %v173
    %1686 = vmatprep.subr.mxu0 %v176
    %1687 = vmatpush1.msra.mxu0 %v175
    %1688 = vmatprep.mubr.f32.mxu0 %v1450
    %1689 = vmatmul.mubr.f32.gmra.mrb[0].mxu0 %v1448
    %v1690 = vpop.f32.mrb[0].mxu0
    %v1691 = vadd.f32 %v1602, %v1690
    %v1692 = vpop.f32.mrb[0].mxu0
    %v1693 = vadd.f32 %v1604, %v1692
    %1694 = vmatprep.mubr.f32.mxu0 %v1456
    %1695 = vmatmul.mubr.f32.gmra.mrb[0].mxu0 %v1454
    %v1696 = vpop.f32.mrb[0].mxu0
    %v1697 = vadd.f32 %v1608, %v1696
    %v1698 = vpop.f32.mrb[0].mxu0
    %v1699 = vadd.f32 %v1610, %v1698
    %1700 = vmatprep.mubr.f32.mxu0 %v1527
    %1701 = vmatmul.mubr.f32.gmra.mrb[0].mxu0 %v1525
    %v1702 = vpop.f32.mrb[0].mxu0
    %v1703 = vadd.f32 %v1614, %v1702
    %v1704 = vpop.f32.mrb[0].mxu0
    %v1705 = vadd.f32 %v1616, %v1704
    %1706 = vmatprep.mubr.f32.mxu0 %v1533
    %1707 = vmatmul.mubr.f32.gmra.mrb[0].mxu0 %v1531
    %v1708 = vpop.f32.mrb[0].mxu0
    %v1709 = vadd.f32 %v1620, %v1708
    %v1710 = vpop.f32.mrb[0].mxu0
    %v1711 = vadd.f32 %v1622, %v1710
    %1712 = vdwg.mxu0
    %v1714 = vlaneseq
    %v1715 = vshrl.u32 %v1714, 7
    %v1716 = vsub.s32 0, %v1715
    %v1717 = vrot.slane %v209, %v1716
    %v1718 = vlaneseq
    %v1719 = vshrl.u32 %v1718, 7
    %v1720 = vsub.s32 1, %v1719
    %v1721 = vrot.slane %v209, %v1720
    %v1724 = vadd.f32 %v1691, %v1717
    %v1725 = vadd.f32 %v1693, %v1721
    %v1726 = vadd.f32 %v1697, %v1717
    %v1727 = vadd.f32 %v1699, %v1721
    %v1728 = vadd.f32 %v1703, %v1717
    %v1729 = vadd.f32 %v1705, %v1721
    %v1730 = vadd.f32 %v1709, %v1717
    %v1731 = vadd.f32 %v1711, %v1721
    %1732 = vst [vmem:[#allocation13] sm:$0xff] %v1724
    %1733 = vst [vmem:[#allocation13 + $0x8] sm:$0xff] %v1725
    %1734 = vst [vmem:[#allocation13 + $0x10] sm:$0xff] %v1726
    %1735 = vst [vmem:[#allocation13 + $0x18] sm:$0xff] %v1727
    %1736 = vst [vmem:[#allocation13 + $0x20] sm:$0xff] %v1728
    %1737 = vst [vmem:[#allocation13 + $0x28] sm:$0xff] %v1729
    %1738 = vst [vmem:[#allocation13 + $0x30] sm:$0xff] %v1730
    %1739 = vst [vmem:[#allocation13 + $0x38] sm:$0xff] %v1731
    // Predicated region
    $region58: #{tpu_custom_call.1} parent=1 // pred_check
      _
    $region59: #{tpu_custom_call.1} parent=1 // pred_check_branch
      %1741 = sbr.rel (0) target = $region61
    $region60: #{tpu_custom_call.1} parent=1 // pred_region
      %s1743 = ssub.s32 1024, 1024
      %1744 = vsyncadd [#allocation4], %s1743
      %s1745 = sshll.u32 [#allocation13], 4
      %s1746 = int_to_ptr.vmem [resolvable:$true] %s1745
      %1751 = dma.vmem_to_hbm [thread:$0]  %s1746, 1024, %s8, [#allocation4], 256, 256, 16
    $region61: #{tpu_custom_call.1} parent=1 // pred_fallthru
      _
    // Predicated region
    $region62: #{tpu_custom_call.1} parent=1 // pred_check
      _
    $region63: #{tpu_custom_call.1} parent=1 // pred_check_branch
      %1753 = sbr.rel (0) target = $region65
    $region64: #{tpu_custom_call.1} parent=1 // pred_region
      %1754 = dma.done [#allocation4], 1024
    $region65: #{tpu_custom_call.1} parent=1 // pred_fallthru
      _
    %1755 = vsyncpa [#allocation3], 1
    %1756 = vsyncpa [#allocation6], 1
    %1757 = vsyncpa [#allocation9], 1
    %1758 = vsyncpa [#allocation12], 1
    %1759 = vsyncpa [#allocation4], 1

</llo_original>
